<compile_context>
chip_gen: v7x
topology: tpu7x:2x2x1
jax: 0.10.0
libtpu: 0.0.40
codegen_flags: <defaults>
</compile_context>

<pallas_src>
import math
import numpy as np
import jax
import jax.numpy as jnp
from jax.experimental import pallas as pl
from jax.experimental.pallas import tpu as pltpu


# ------------------------ parameter setup (plain JAX) ---------------------- #

def make_padconv2d_params(key, in_channels, filters, kernel_size=3,
                          invariant=False, zero_mean=False, bound_norm=False,
                          use_bias=False):
    """Deterministic parameter construction mirroring PadConv2D.__init__."""
    std = np.sqrt(1.0 / (in_channels * kernel_size ** 2))
    if invariant:
        assert kernel_size == 3
        w_shape = (filters, in_channels, 1, 3)
        mask = jnp.asarray([1.0, 4.0, 4.0], jnp.float32)[None, None, None, :]
    else:
        w_shape = (filters, in_channels, kernel_size, kernel_size)
        mask = jnp.ones((1, 1, kernel_size, kernel_size), jnp.float32)

    weight = std * jax.random.normal(key, w_shape, dtype=jnp.float32)

    if zero_mean or bound_norm:
        if zero_mean:
            mean = jnp.sum(weight * mask, axis=(1, 2, 3), keepdims=True) / (
                in_channels * kernel_size ** 2)
            weight = weight - mean
        if bound_norm:  # proj(surface=True) at init
            norm = jnp.sqrt(jnp.sum(weight ** 2 * mask, axis=(1, 2, 3),
                                    keepdims=True))
            weight = weight / norm

    bias = jnp.zeros((filters,), jnp.float32) if use_bias else None
    return weight, bias


def get_full_weight(weight, invariant):
    """Mirror PadConv2D.get_weight() (invariant -> rotationally-symmetric 3x3)."""
    if not invariant:
        return weight
    w00 = weight[:, :, 0, 0]  # center
    w01 = weight[:, :, 0, 1]  # edge neighbours
    w02 = weight[:, :, 0, 2]  # corner neighbours
    row0 = jnp.stack([w02, w01, w02], axis=-1)
    row1 = jnp.stack([w01, w00, w01], axis=-1)
    return jnp.stack([row0, row1, row0], axis=-2)  # (F, C, 3, 3)


# ------------------------------- helpers ------------------------------------ #

def _choose_tile_rows(Ho, Wo, requested=None, target_lanes=1024):
    """Pick output-row tile size so L = th*Wo lands in the 512-2048 lane range
    and, when the row axis is split, L is a multiple of 128 (unmasked stores)."""
    if requested is not None:
        th = max(1, min(int(requested), Ho))
    else:
        th = max(1, min(Ho, -(-target_lanes // Wo)))
    if th < Ho:
        step = 128 // math.gcd(Wo, 128)     # smallest th making th*Wo % 128 == 0
        th = -(-th // step) * step
        if th >= Ho:
            th = Ho
    return th


def _padded_vmem_bytes(shape, dtype):
    """Rough lane/sublane-padded VMEM footprint of one buffer."""
    it = jnp.dtype(dtype).itemsize
    sub = max(8, 32 // it)                  # 8 (f32), 16 (bf16), 32 (int8)
    s = (1,) * max(0, 2 - len(shape)) + tuple(int(d) for d in shape)
    lead = 1
    for d in s[:-2]:
        lead *= d
    return lead * (-(-s[-2] // sub) * sub) * (-(-s[-1] // 128) * 128) * it


# ------------------------------ forward pass ------------------------------- #

def pad_conv2d_forward(x, weight, bias=None, *, pad=True, stride=1, dilation=1,
                       groups=1, tile_rows=None, compute_dtype=None):
    """PadConv2D.forward: symmetric pad (optox real_pad2d) + conv2d (VALID)."""
    assert stride == 1 and dilation == 1 and groups == 1

    out_dtype = x.dtype
    cdt = out_dtype if compute_dtype is None else compute_dtype
    N, C, H, W = x.shape
    F, Cw, KH, KW = weight.shape
    assert Cw == C

    ph, pw = KH // 2, KW // 2
    if pad and (ph > 0 or pw > 0):
        x = jnp.pad(x, ((0, 0), (0, 0), (ph, ph), (pw, pw)), mode="symmetric")
    Hp, Wp = x.shape[2], x.shape[3]
    Ho, Wo = Hp - KH + 1, Wp - KW + 1

    # Row-tile size; pad Ho up to a multiple of th (extra rows dropped later).
    th = _choose_tile_rows(Ho, Wo, tile_rows)
    nh = -(-Ho // th)
    Ho_pad = nh * th
    Th = th + KH - 1
    L = th * Wo

    # NHWC so channels sit on the lane axis inside the MXU contraction;
    # pad bottom rows (zeros) so every row tile has a full Th-row window.
    x_nhwc = jnp.transpose(x, (0, 2, 3, 1)).astype(cdt)
    if Ho_pad != Ho:
        x_nhwc = jnp.pad(x_nhwc, ((0, 0), (0, Ho_pad - Ho), (0, 0), (0, 0)))
    Hp_pad = Ho_pad + KH - 1

    # Per-tap weights: (kh*KW + kw) -> (F, C), matching the in-kernel taps.
    w_taps = jnp.transpose(weight, (2, 3, 0, 1)).reshape(KH * KW, F, C)
    w_taps = w_taps.astype(cdt)

    b_col = (jnp.zeros((F, 1), jnp.float32) if bias is None
             else bias.reshape(F, 1).astype(jnp.float32))

    def kernel(x_ref, w_ref, b_ref, o_ref):
        # x_ref: (Hp_pad, Wp, C) full padded image of this batch element
        # w_ref: (KH*KW, F, C); b_ref: (F, 1) f32; o_ref: (F, L) lane-dense.
        t = pl.program_id(1)
        row0 = pl.multiple_of(t * th, th)
        win = x_ref[pl.ds(row0, Th), :, :]            # (Th, Wp, C) one dyn load
        acc = None
        # TODO(synk): for larger C, fuse the KH*KW taps into a single K=KH*KW*C
        #             matmul (concat along the contraction axis) to cut MXU
        #             pushes; at C=4 the kernel is DMA/overhead bound anyway.
        for kh in range(KH):
            for kw in range(KW):
                tap = win[kh:kh + th, kw:kw + Wo, :].reshape(L, C)
                part = jax.lax.dot_general(
                    w_ref[kh * KW + kw], tap,
                    dimension_numbers=(((1,), (1,)), ((), ())),
                    preferred_element_type=jnp.float32)       # (F, L)
                acc = part if acc is None else acc + part
        acc = acc + b_ref[...]                                 # fused bias
        o_ref[...] = acc.astype(o_ref.dtype)                   # lane-dense vst

    # Explicit VMEM budget (lane-padded); v7x has 64 MiB physical VMEM, so
    # tile_rows must keep this comfortably below ~48 MiB.
    est = (2 * _padded_vmem_bytes((Hp_pad, Wp, C), cdt)        # dbl-buf input
           + 2 * _padded_vmem_bytes((F, L), out_dtype)         # dbl-buf output
           + _padded_vmem_bytes((KH * KW, F, C), cdt)
           + _padded_vmem_bytes((F, 1), jnp.float32)
           + 2 * _padded_vmem_bytes((Th, Wp, C), cdt)          # in-kernel window
           + 4 * _padded_vmem_bytes((L, C), cdt)               # tap temporaries
           + 2 * _padded_vmem_bytes((F, L), jnp.float32))      # accumulator
    vmem_limit = int(min(max(2 * est, 32 << 20), 112 << 20))

    itemsize = jnp.dtype(cdt).itemsize
    flops = 2 * N * Ho * Wo * C * KH * KW * F
    bytes_accessed = (x_nhwc.size * itemsize + w_taps.size * itemsize
                      + b_col.size * 4
                      + N * F * Ho_pad * Wo * jnp.dtype(out_dtype).itemsize)

    out = pl.pallas_call(
        kernel,
        out_shape=jax.ShapeDtypeStruct((N, F, Ho_pad * Wo), out_dtype),
        grid=(N, nh),
        in_specs=[
            # Full padded image per batch element; block index is constant in
            # t, so it is DMA'd once per batch element (no halo duplication).
            pl.BlockSpec((None, Hp_pad, Wp, C), lambda n, t: (n, 0, 0, 0)),
            pl.BlockSpec((KH * KW, F, C), lambda n, t: (0, 0, 0)),
            pl.BlockSpec((F, 1), lambda n, t: (0, 0)),
        ],
        # F-major flattened output: wrapper fix-up is a pure reshape.
        out_specs=pl.BlockSpec((None, F, L), lambda n, t: (n, 0, t)),
        compiler_params=pltpu.CompilerParams(
            dimension_semantics=("parallel", "parallel"),
            vmem_limit_bytes=vmem_limit),
        cost_estimate=pl.CostEstimate(flops=int(flops), transcendentals=0,
                                      bytes_accessed=int(bytes_accessed)),
    )(x_nhwc, w_taps, b_col)

    out = out.reshape(N, F, Ho_pad, Wo)
    if Ho_pad != Ho:
        out = out[:, :, :Ho, :]
    return out


# ----------------------------------- main ---------------------------------- #

if __name__ == "__main__":
    key = jax.random.PRNGKey(0)
    k_x, k_w = jax.random.split(key)

    # Module config: PadConv2D(in_channels=4, filters=8, kernel_size=3)
    in_channels, filters, kernel_size = 4, 8, 3
    N, H, W = 2, 16, 16

    x = jax.random.normal(k_x, (N, in_channels, H, W), dtype=jnp.float32)
    weight_param, bias = make_padconv2d_params(
        k_w, in_channels, filters, kernel_size,
        invariant=False, zero_mean=False, bound_norm=False, use_bias=False)
    weight = get_full_weight(weight_param, invariant=False)

    fwd = jax.jit(lambda xx, ww: pad_conv2d_forward(xx, ww, None))
    out = jax.block_until_ready(fwd(x, weight))
    assert out.shape == (N, filters, H, W), out.shape

    # Reference: XLA f32 conv (highest precision) on the symmetrically padded
    # input.  Tolerance is kept loose enough to be robust to MXU f32-pass
    # precision differences across TPU generations; a structurally wrong
    # kernel would be off by O(1), far outside this band.
    x_pad = jnp.pad(x, ((0, 0), (0, 0), (1, 1), (1, 1)), mode="symmetric")
    ref = jax.lax.conv_general_dilated(
        x_pad, weight, window_strides=(1, 1), padding="VALID",
        dimension_numbers=("NCHW", "OIHW", "NCHW"),
        precision=jax.lax.Precision.HIGHEST)
    ref = jax.block_until_ready(ref)

    np.testing.assert_allclose(np.asarray(out), np.asarray(ref),
                               rtol=2e-2, atol=2e-2)

    print("KERNEL_OK")
</pallas_src>

<mosaic_0001>
module attributes {stable_mosaic.version = 11 : i64} {
  func.func @kernel(%arg0: i32, %arg1: i32, %arg2: memref<1x18x18x4xf32, #tpu.memory_space<vmem>>, %arg3: memref<9x8x4xf32, #tpu.memory_space<vmem>>, %arg4: memref<8x1xf32, #tpu.memory_space<vmem>>, %arg5: memref<1x8x256xf32, #tpu.memory_space<vmem>>) attributes {dimension_semantics = [#tpu.dimension_semantics<parallel>, #tpu.dimension_semantics<parallel>], iteration_bounds = array<i64: 2, 1>, scalar_prefetch = 0 : i64, scratch_operands = 0 : i64, tpu.core_type = #tpu.core_type<tc>, window_params = [{transform_indices = @transform_0, window_bounds = array<i64: 1, 18, 18, 4>}, {pipeline_mode = #tpu.pipeline_mode<synchronous>, transform_indices = @transform_1, window_bounds = array<i64: 9, 8, 4>}, {pipeline_mode = #tpu.pipeline_mode<synchronous>, transform_indices = @transform_2, window_bounds = array<i64: 8, 1>}, {transform_indices = @transform_3, window_bounds = array<i64: 1, 8, 256>}]} {
    %c16_i32 = arith.constant 16 : i32
    %0 = arith.muli %arg1, %c16_i32 : i32
    %1 = tpu.assume_multiple %0, 16 : i32
    %c0 = arith.constant 0 : index
    %2 = arith.index_cast %1 : i32 to index
    %c0_0 = arith.constant 0 : index
    %c0_1 = arith.constant 0 : index
    %3 = vector.load %arg2[%c0, %2, %c0_0, %c0_1] : memref<1x18x18x4xf32, #tpu.memory_space<vmem>>, vector<1x18x18x4xf32>
    %4 = vector.shape_cast %3 : vector<1x18x18x4xf32> to vector<18x18x4xf32>
    %5 = vector.extract_strided_slice %4 {offsets = [0, 0, 0], sizes = [16, 16, 4], strides = [1, 1, 1]} : vector<18x18x4xf32> to vector<16x16x4xf32>
    %6 = vector.shape_cast %5 : vector<16x16x4xf32> to vector<256x4xf32>
    %c0_2 = arith.constant 0 : index
    %c0_3 = arith.constant 0 : index
    %c0_4 = arith.constant 0 : index
    %7 = vector.load %arg3[%c0_2, %c0_3, %c0_4] : memref<9x8x4xf32, #tpu.memory_space<vmem>>, vector<1x8x4xf32>
    %8 = vector.shape_cast %7 : vector<1x8x4xf32> to vector<8x4xf32>
    %cst = arith.constant dense<0.000000e+00> : vector<8x256xf32>
    %9 = tpu.matmul %8, %6, %cst {dimension_numbers = #tpu.dot_dimension_numbers<[1], [1], [0], [0], [0, 0, 1, 0], [], []>} : vector<8x4xf32>, vector<256x4xf32>, vector<8x256xf32> -> vector<8x256xf32>
    %10 = vector.extract_strided_slice %4 {offsets = [0, 1, 0], sizes = [16, 16, 4], strides = [1, 1, 1]} : vector<18x18x4xf32> to vector<16x16x4xf32>
    %11 = vector.shape_cast %10 : vector<16x16x4xf32> to vector<256x4xf32>
    %c1 = arith.constant 1 : index
    %c0_5 = arith.constant 0 : index
    %c0_6 = arith.constant 0 : index
    %12 = vector.load %arg3[%c1, %c0_5, %c0_6] : memref<9x8x4xf32, #tpu.memory_space<vmem>>, vector<1x8x4xf32>
    %13 = vector.shape_cast %12 : vector<1x8x4xf32> to vector<8x4xf32>
    %cst_7 = arith.constant dense<0.000000e+00> : vector<8x256xf32>
    %14 = tpu.matmul %13, %11, %cst_7 {dimension_numbers = #tpu.dot_dimension_numbers<[1], [1], [0], [0], [0, 0, 1, 0], [], []>} : vector<8x4xf32>, vector<256x4xf32>, vector<8x256xf32> -> vector<8x256xf32>
    %15 = arith.addf %9, %14 : vector<8x256xf32>
    %16 = vector.extract_strided_slice %4 {offsets = [0, 2, 0], sizes = [16, 16, 4], strides = [1, 1, 1]} : vector<18x18x4xf32> to vector<16x16x4xf32>
    %17 = vector.shape_cast %16 : vector<16x16x4xf32> to vector<256x4xf32>
    %c2 = arith.constant 2 : index
    %c0_8 = arith.constant 0 : index
    %c0_9 = arith.constant 0 : index
    %18 = vector.load %arg3[%c2, %c0_8, %c0_9] : memref<9x8x4xf32, #tpu.memory_space<vmem>>, vector<1x8x4xf32>
    %19 = vector.shape_cast %18 : vector<1x8x4xf32> to vector<8x4xf32>
    %cst_10 = arith.constant dense<0.000000e+00> : vector<8x256xf32>
    %20 = tpu.matmul %19, %17, %cst_10 {dimension_numbers = #tpu.dot_dimension_numbers<[1], [1], [0], [0], [0, 0, 1, 0], [], []>} : vector<8x4xf32>, vector<256x4xf32>, vector<8x256xf32> -> vector<8x256xf32>
    %21 = arith.addf %15, %20 : vector<8x256xf32>
    %22 = vector.extract_strided_slice %4 {offsets = [1, 0, 0], sizes = [16, 16, 4], strides = [1, 1, 1]} : vector<18x18x4xf32> to vector<16x16x4xf32>
    %23 = vector.shape_cast %22 : vector<16x16x4xf32> to vector<256x4xf32>
    %c3 = arith.constant 3 : index
    %c0_11 = arith.constant 0 : index
    %c0_12 = arith.constant 0 : index
    %24 = vector.load %arg3[%c3, %c0_11, %c0_12] : memref<9x8x4xf32, #tpu.memory_space<vmem>>, vector<1x8x4xf32>
    %25 = vector.shape_cast %24 : vector<1x8x4xf32> to vector<8x4xf32>
    %cst_13 = arith.constant dense<0.000000e+00> : vector<8x256xf32>
    %26 = tpu.matmul %25, %23, %cst_13 {dimension_numbers = #tpu.dot_dimension_numbers<[1], [1], [0], [0], [0, 0, 1, 0], [], []>} : vector<8x4xf32>, vector<256x4xf32>, vector<8x256xf32> -> vector<8x256xf32>
    %27 = arith.addf %21, %26 : vector<8x256xf32>
    %28 = vector.extract_strided_slice %4 {offsets = [1, 1, 0], sizes = [16, 16, 4], strides = [1, 1, 1]} : vector<18x18x4xf32> to vector<16x16x4xf32>
    %29 = vector.shape_cast %28 : vector<16x16x4xf32> to vector<256x4xf32>
    %c4 = arith.constant 4 : index
    %c0_14 = arith.constant 0 : index
    %c0_15 = arith.constant 0 : index
    %30 = vector.load %arg3[%c4, %c0_14, %c0_15] : memref<9x8x4xf32, #tpu.memory_space<vmem>>, vector<1x8x4xf32>
    %31 = vector.shape_cast %30 : vector<1x8x4xf32> to vector<8x4xf32>
    %cst_16 = arith.constant dense<0.000000e+00> : vector<8x256xf32>
    %32 = tpu.matmul %31, %29, %cst_16 {dimension_numbers = #tpu.dot_dimension_numbers<[1], [1], [0], [0], [0, 0, 1, 0], [], []>} : vector<8x4xf32>, vector<256x4xf32>, vector<8x256xf32> -> vector<8x256xf32>
    %33 = arith.addf %27, %32 : vector<8x256xf32>
    %34 = vector.extract_strided_slice %4 {offsets = [1, 2, 0], sizes = [16, 16, 4], strides = [1, 1, 1]} : vector<18x18x4xf32> to vector<16x16x4xf32>
    %35 = vector.shape_cast %34 : vector<16x16x4xf32> to vector<256x4xf32>
    %c5 = arith.constant 5 : index
    %c0_17 = arith.constant 0 : index
    %c0_18 = arith.constant 0 : index
    %36 = vector.load %arg3[%c5, %c0_17, %c0_18] : memref<9x8x4xf32, #tpu.memory_space<vmem>>, vector<1x8x4xf32>
    %37 = vector.shape_cast %36 : vector<1x8x4xf32> to vector<8x4xf32>
    %cst_19 = arith.constant dense<0.000000e+00> : vector<8x256xf32>
    %38 = tpu.matmul %37, %35, %cst_19 {dimension_numbers = #tpu.dot_dimension_numbers<[1], [1], [0], [0], [0, 0, 1, 0], [], []>} : vector<8x4xf32>, vector<256x4xf32>, vector<8x256xf32> -> vector<8x256xf32>
    %39 = arith.addf %33, %38 : vector<8x256xf32>
    %40 = vector.extract_strided_slice %4 {offsets = [2, 0, 0], sizes = [16, 16, 4], strides = [1, 1, 1]} : vector<18x18x4xf32> to vector<16x16x4xf32>
    %41 = vector.shape_cast %40 : vector<16x16x4xf32> to vector<256x4xf32>
    %c6 = arith.constant 6 : index
    %c0_20 = arith.constant 0 : index
    %c0_21 = arith.constant 0 : index
    %42 = vector.load %arg3[%c6, %c0_20, %c0_21] : memref<9x8x4xf32, #tpu.memory_space<vmem>>, vector<1x8x4xf32>
    %43 = vector.shape_cast %42 : vector<1x8x4xf32> to vector<8x4xf32>
    %cst_22 = arith.constant dense<0.000000e+00> : vector<8x256xf32>
    %44 = tpu.matmul %43, %41, %cst_22 {dimension_numbers = #tpu.dot_dimension_numbers<[1], [1], [0], [0], [0, 0, 1, 0], [], []>} : vector<8x4xf32>, vector<256x4xf32>, vector<8x256xf32> -> vector<8x256xf32>
    %45 = arith.addf %39, %44 : vector<8x256xf32>
    %46 = vector.extract_strided_slice %4 {offsets = [2, 1, 0], sizes = [16, 16, 4], strides = [1, 1, 1]} : vector<18x18x4xf32> to vector<16x16x4xf32>
    %47 = vector.shape_cast %46 : vector<16x16x4xf32> to vector<256x4xf32>
    %c7 = arith.constant 7 : index
    %c0_23 = arith.constant 0 : index
    %c0_24 = arith.constant 0 : index
    %48 = vector.load %arg3[%c7, %c0_23, %c0_24] : memref<9x8x4xf32, #tpu.memory_space<vmem>>, vector<1x8x4xf32>
    %49 = vector.shape_cast %48 : vector<1x8x4xf32> to vector<8x4xf32>
    %cst_25 = arith.constant dense<0.000000e+00> : vector<8x256xf32>
    %50 = tpu.matmul %49, %47, %cst_25 {dimension_numbers = #tpu.dot_dimension_numbers<[1], [1], [0], [0], [0, 0, 1, 0], [], []>} : vector<8x4xf32>, vector<256x4xf32>, vector<8x256xf32> -> vector<8x256xf32>
    %51 = arith.addf %45, %50 : vector<8x256xf32>
    %52 = vector.extract_strided_slice %4 {offsets = [2, 2, 0], sizes = [16, 16, 4], strides = [1, 1, 1]} : vector<18x18x4xf32> to vector<16x16x4xf32>
    %53 = vector.shape_cast %52 : vector<16x16x4xf32> to vector<256x4xf32>
    %c8 = arith.constant 8 : index
    %c0_26 = arith.constant 0 : index
    %c0_27 = arith.constant 0 : index
    %54 = vector.load %arg3[%c8, %c0_26, %c0_27] : memref<9x8x4xf32, #tpu.memory_space<vmem>>, vector<1x8x4xf32>
    %55 = vector.shape_cast %54 : vector<1x8x4xf32> to vector<8x4xf32>
    %cst_28 = arith.constant dense<0.000000e+00> : vector<8x256xf32>
    %56 = tpu.matmul %55, %53, %cst_28 {dimension_numbers = #tpu.dot_dimension_numbers<[1], [1], [0], [0], [0, 0, 1, 0], [], []>} : vector<8x4xf32>, vector<256x4xf32>, vector<8x256xf32> -> vector<8x256xf32>
    %57 = arith.addf %51, %56 : vector<8x256xf32>
    %c0_29 = arith.constant 0 : index
    %c0_30 = arith.constant 0 : index
    %58 = vector.load %arg4[%c0_29, %c0_30] : memref<8x1xf32, #tpu.memory_space<vmem>>, vector<8x1xf32>
    %59 = vector.broadcast %58 : vector<8x1xf32> to vector<8x256xf32>
    %60 = arith.addf %57, %59 : vector<8x256xf32>
    %c0_31 = arith.constant 0 : index
    %c0_32 = arith.constant 0 : index
    %c0_33 = arith.constant 0 : index
    %61 = vector.load %arg5[%c0_31, %c0_32, %c0_33] : memref<1x8x256xf32, #tpu.memory_space<vmem>>, vector<1x8x256xf32>
    %62 = vector.shape_cast %61 : vector<1x8x256xf32> to vector<8x256xf32>
    %63 = vector.shape_cast %60 : vector<8x256xf32> to vector<1x8x256xf32>
    tpu.vector_store %arg5[%c0_31, %c0_32, %c0_33], %63 {strides = array<i32>} : memref<1x8x256xf32, #tpu.memory_space<vmem>>, vector<1x8x256xf32>,
    return
  }
  func.func @transform_0(%arg0: i32, %arg1: i32) -> (i32, i32, i32, i32) {
    %c0_i32 = arith.constant 0 : i32
    %c0_i32_0 = arith.constant 0 : i32
    %c0_i32_1 = arith.constant 0 : i32
    %c0_i32_2 = arith.constant 0 : i32
    return %arg0, %c0_i32, %c0_i32_0, %c0_i32_1 : i32, i32, i32, i32
  }
  func.func @transform_1(%arg0: i32, %arg1: i32) -> (i32, i32, i32) {
    %c0_i32 = arith.constant 0 : i32
    %c0_i32_0 = arith.constant 0 : i32
    %c0_i32_1 = arith.constant 0 : i32
    %c0_i32_2 = arith.constant 0 : i32
    return %c0_i32, %c0_i32_0, %c0_i32_1 : i32, i32, i32
  }
  func.func @transform_2(%arg0: i32, %arg1: i32) -> (i32, i32) {
    %c0_i32 = arith.constant 0 : i32
    %c0_i32_0 = arith.constant 0 : i32
    %c0_i32_1 = arith.constant 0 : i32
    return %c0_i32, %c0_i32_0 : i32, i32
  }
  func.func @transform_3(%arg0: i32, %arg1: i32) -> (i32, i32, i32) {
    %c0_i32 = arith.constant 0 : i32
    %c0_i32_0 = arith.constant 0 : i32
    return %arg0, %c0_i32, %arg1 : i32, i32, i32
  }
}

</mosaic_0001>

<llo_original>
// kernel: _lambda_.1
$region0: #{_lambda_.1}
  #allocation0 [shape = 'u32[]', space=smem, size = 0x4, offset = 0x4, fixed_abs, tag = 'smem constant byte address 0x4 - core index']
  #allocation1 [shape = 'u32[144,128]{1,0:T(1,128)}', space=vmem, size = 0x12000, scoped, tag = 'internal scratch']
  %s0 = inlined_call_operand.vmem [shape: f32[2,18,18,4], index: 0, kind: input, shape index: {}]
  %s1 = inlined_call_operand.vmem [shape: f32[9,8,4], index: 1, kind: input, shape index: {}]
  %s2 = inlined_call_operand.vmem [shape: f32[8,1], index: 2, kind: input, shape index: {}]
  %s3 = inlined_call_operand.vmem [shape: f32[2,8,256], index: 3, kind: output, shape index: {}]
  %s4 = sld [smem:[#allocation0]]
  $region45: #{_lambda_.1} parent=0
    _
  %s6 = ssub.s32 1, %s4
  %s7 = scalar_select 0, %s6, %s4
  loop: start=0, step=1, limit=4
  $region2: #{_lambda_.1} parent=0 // loop_pre_header
    _
  $region3: #{_lambda_.1} parent=0 // loop_header
    %s9 = sphi 0, %s13
    %p10 = scmp.ge.s32.totalorder %s9, 4
    %s16 = sphi 0, %s28
    %s17 = sphi 0, %s24
    %s18 = sphi 0, %s16
    %s19 = sphi 0, %s17
    %s20 = sphi 0, %s18
    %s21 = sphi 0, %s19
    %s31 = sphi 0, %s33
    %s34 = sphi 0, %s31
    %s35 = sphi 0, %s34
    %s51 = sphi 0, %s35
    %s55 = sphi 0, %s55
    %s57 = sphi 0, %s55
    %s58 = sphi 0, %s57
    %s72 = sphi 0, %s58
    %s76 = sphi 0, %s76
    %s78 = sphi 0, %s76
    %s79 = sphi 0, %s78
    %s93 = sphi 0, %s79
    %s101 = sphi 0, %s103
    %s104 = sphi 0, %s101
    %s105 = sphi 0, %s104
    %s121 = sphi 0, %s105
  $region4: #{_lambda_.1} parent=0 // loop_header_branch
    %12 = sbr.rel (%p10) target = $region8
  $region5: #{_lambda_.1} parent=0 // loop_body
    %s14 = ssub.s32 %s9, 1
    %s15 = ssub.s32 %s9, 2
    %s22 = sadd.s32 1, %s17
    %p23 = scmp.ge.s32.totalorder %s22, 1
    %s24 = scalar_select %p23, 0, %s22
    %s25 = sadd.s32 1, %s16
    %s26 = scalar_select %p23, %s25, %s16
    %p27 = scmp.ge.s32.totalorder %s26, 2
    %s28 = scalar_select %p27, 0, %s26
    %s29 = ssub.s32 %s16, %s28
    %p30 = scmp.eq.s32.totalorder %s29, 0
    %s32 = sadd.s32 %s31, 1
    %s33 = scalar_select %p30, %s31, %s32
    %p36 = pneg %p30
    %p37 = scmp.eq.s32.totalorder %s9, 1
    %p38 = por %p36, %p37
    %p39 = scmp.ne.s32.totalorder %s31, %s34
    %p40 = scmp.eq.s32.totalorder %s9, 0
    %p41 = por %p39, %p40
    %p42 = scmp.ne.s32.totalorder %s31, %s34
    %p43 = scmp.eq.s32.totalorder %s14, 1
    %p44 = por %p42, %p43
    %p45 = scmp.ne.s32.totalorder %s34, %s35
    %p46 = scmp.eq.s32.totalorder %s14, 0
    %p47 = por %p45, %p46
    %p48 = scmp.ne.s32.totalorder %s34, %s35
    %p49 = scmp.eq.s32.totalorder %s15, 1
    %p50 = por %p48, %p49
    %p52 = scmp.ne.s32.totalorder %s35, %s51
    %p53 = scmp.eq.s32.totalorder %s15, 0
    %p54 = por %p52, %p53
    %s56 = sadd.s32 %s55, 1
    %p59 = scmp.eq.s32.totalorder %s9, 1
    %p60 = scmp.ne.s32.totalorder %s55, %s57
    %p61 = scmp.eq.s32.totalorder %s9, 0
    %p62 = por %p60, %p61
    %p63 = scmp.ne.s32.totalorder %s55, %s57
    %p64 = scmp.eq.s32.totalorder %s14, 1
    %p65 = por %p63, %p64
    %p66 = scmp.ne.s32.totalorder %s57, %s58
    %p67 = scmp.eq.s32.totalorder %s14, 0
    %p68 = por %p66, %p67
    %p69 = scmp.ne.s32.totalorder %s57, %s58
    %p70 = scmp.eq.s32.totalorder %s15, 1
    %p71 = por %p69, %p70
    %p73 = scmp.ne.s32.totalorder %s58, %s72
    %p74 = scmp.eq.s32.totalorder %s15, 0
    %p75 = por %p73, %p74
    %s77 = sadd.s32 %s76, 1
    %p80 = scmp.eq.s32.totalorder %s9, 1
    %p81 = scmp.ne.s32.totalorder %s76, %s78
    %p82 = scmp.eq.s32.totalorder %s9, 0
    %p83 = por %p81, %p82
    %p84 = scmp.ne.s32.totalorder %s76, %s78
    %p85 = scmp.eq.s32.totalorder %s14, 1
    %p86 = por %p84, %p85
    %p87 = scmp.ne.s32.totalorder %s78, %s79
    %p88 = scmp.eq.s32.totalorder %s14, 0
    %p89 = por %p87, %p88
    %p90 = scmp.ne.s32.totalorder %s78, %s79
    %p91 = scmp.eq.s32.totalorder %s15, 1
    %p92 = por %p90, %p91
    %p94 = scmp.ne.s32.totalorder %s79, %s93
    %p95 = scmp.eq.s32.totalorder %s15, 0
    %p96 = por %p94, %p95
    %s97 = ssub.s32 %s16, %s28
    %s98 = ssub.s32 %s17, %s24
    %s99 = sor.u32 %s97, %s98
    %p100 = scmp.eq.s32.totalorder %s99, 0
    %s102 = sadd.s32 %s101, 1
    %s103 = scalar_select %p100, %s101, %s102
    %p106 = pneg %p100
    %p107 = scmp.eq.s32.totalorder %s9, 1
    %p108 = por %p106, %p107
    %p109 = scmp.ne.s32.totalorder %s101, %s104
    %p110 = scmp.eq.s32.totalorder %s9, 0
    %p111 = por %p109, %p110
    %p112 = scmp.ne.s32.totalorder %s101, %s104
    %p113 = scmp.eq.s32.totalorder %s14, 1
    %p114 = por %p112, %p113
    %p115 = scmp.ne.s32.totalorder %s104, %s105
    %p116 = scmp.eq.s32.totalorder %s14, 0
    %p117 = por %p115, %p116
    %p118 = scmp.ne.s32.totalorder %s104, %s105
    %p119 = scmp.eq.s32.totalorder %s15, 1
    %p120 = por %p118, %p119
    %p122 = scmp.ne.s32.totalorder %s105, %s121
    %p123 = scmp.eq.s32.totalorder %s15, 0
    %p124 = por %p122, %p123
    %p125 = scmp.le.s32.totalorder 1, %s9
    %p126 = scmp.lt.s32.totalorder %s9, 3
    %p127 = pnand %p125, %p126
    %p128 = pneg %p127
    // Predicated region
    $region9: #{_lambda_.1} parent=5 // pred_check
      _
    $region10: #{_lambda_.1} parent=5 // pred_check_branch
      %130 = sbr.rel (%p127) target = $region12
    $region11: #{_lambda_.1} parent=5 // pred_region
      %s131 = ssub.s32 %s9, 1
      // Predicated region
      $region13: #{_lambda_.1} parent=11 // pred_check
        %p132 = pneg %p68
      $region14: #{_lambda_.1} parent=11 // pred_check_branch
        %134 = sbr.rel (%p132) target = $region16
      $region15: #{_lambda_.1} parent=11 // pred_region
        _
      $region16: #{_lambda_.1} parent=11 // pred_fallthru
        _
      // Predicated region
      $region17: #{_lambda_.1} parent=11 // pred_check
        %p135 = pneg %p89
      $region18: #{_lambda_.1} parent=11 // pred_check_branch
        %137 = sbr.rel (%p135) target = $region20
      $region19: #{_lambda_.1} parent=11 // pred_region
        _
      $region20: #{_lambda_.1} parent=11 // pred_fallthru
        _
    $region12: #{_lambda_.1} parent=5 // pred_fallthru
      _
    %p138 = scmp.lt.s32.totalorder %s9, 2
    // Predicated region
    $region21: #{_lambda_.1} parent=5 // pred_check
      %p139 = pneg %p138
    $region22: #{_lambda_.1} parent=5 // pred_check_branch
      %141 = sbr.rel (%p139) target = $region24
    $region23: #{_lambda_.1} parent=5 // pred_region
      // Predicated region
      $region25: #{_lambda_.1} parent=23 // pred_check
        %p142 = pneg %p41
      $region26: #{_lambda_.1} parent=23 // pred_check_branch
        %144 = sbr.rel (%p142) target = $region28
      $region27: #{_lambda_.1} parent=23 // pred_region
        %p145 = scmp.lt.s32.totalorder %s16, 1
        %s146 = scalar_select %p145, %s16, 1
        %s147 = smul.addr %s146, 54
        %s148 = smul.addr %s147, 8
        %s149 = scalar_lea.vmem %s0, %s148
      $region28: #{_lambda_.1} parent=23 // pred_fallthru
        _
    $region24: #{_lambda_.1} parent=5 // pred_fallthru
      _
    %p150 = scmp.le.s32.totalorder 1, %s9
    %p151 = scmp.lt.s32.totalorder %s9, 3
    %p152 = pnand %p150, %p151
    %p153 = pneg %p152
    // Predicated region
    $region29: #{_lambda_.1} parent=5 // pred_check
      _
    $region30: #{_lambda_.1} parent=5 // pred_check_branch
      %155 = sbr.rel (%p152) target = $region32
    $region31: #{_lambda_.1} parent=5 // pred_region
      %s156 = ssub.s32 %s9, 1
      %p157 = scmp.lt.s32.totalorder %s18, 1
      %s158 = scalar_select %p157, %s18, 1
      %s159 = smul.addr %s158, 54
      %s160 = smul.addr %s159, 8
      %s161 = scalar_lea.vmem %s0, %s160
      %p162 = pneg %p47
      %p163 = pneg %p44
      %p164 = pneg %p68
      %p165 = pneg %p65
      %p166 = pneg %p89
      %p167 = pneg %p86
      %p168 = pneg %p117
      %p169 = pneg %p114
      %s170 = smul.u32 2, %s19
      %p171 = scmp.lt.s32.totalorder %s18, 1
      %s172 = scalar_select %p171, %s18, 1
      %p173 = scmp.lt.s32.totalorder %s170, 1
      %s174 = scalar_select %p173, %s170, 1
      %s175 = smul.addr %s172, 2
      %s176 = sadd.s32 %s174, %s175
      %s177 = smul.addr %s176, 8
      %s178 = scalar_lea.vmem %s3, %s177
      %p179 = scmp.lt.s32.totalorder %s18, 1
      %s180 = scalar_select %p179, %s18, 1
      %s181 = smul.addr %s180, 54
      %s182 = smul.addr %s181, 8
      %s183 = scalar_lea.vmem %s0, %s182
      %s184 = smul.u32 2, %s19
      %p185 = scmp.lt.s32.totalorder %s18, 1
      %s186 = scalar_select %p185, %s18, 1
      %p187 = scmp.lt.s32.totalorder %s184, 1
      %s188 = scalar_select %p187, %s184, 1
      %s189 = smul.addr %s186, 2
      %s190 = sadd.s32 %s188, %s189
      %s191 = smul.addr %s190, 8
      %s192 = scalar_lea.vmem %s3, %s191
      %s193 = smul.u32 2, %s19
      %s194 = smul.u32 %s19, 16
      %s195 = smul.u32 %s194, 24
      %s196 = scalar_lea.vmem %s183, %s195
      %v197 = vld [vmem:[%s196] sm:$0xff]
      %v198 = vld [vmem:[%s196 + $0x8] sm:$0xff]
      %v199 = vld [vmem:[%s196 + $0x10] sm:$0x3]
      %v200 = vld [vmem:[%s196 + $0x18] sm:$0xff]
      %v201 = vld [vmem:[%s196 + $0x20] sm:$0xff]
      %v202 = vld [vmem:[%s196 + $0x28] sm:$0x3]
      %v203 = vld [vmem:[%s196 + $0x30] sm:$0xff]
      %v204 = vld [vmem:[%s196 + $0x38] sm:$0xff]
      %v205 = vld [vmem:[%s196 + $0x40] sm:$0x3]
      %v206 = vld [vmem:[%s196 + $0x48] sm:$0xff]
      %v207 = vld [vmem:[%s196 + $0x50] sm:$0xff]
      %v208 = vld [vmem:[%s196 + $0x58] sm:$0x3]
      %v209 = vld [vmem:[%s196 + $0x60] sm:$0xff]
      %v210 = vld [vmem:[%s196 + $0x68] sm:$0xff]
      %v211 = vld [vmem:[%s196 + $0x70] sm:$0x3]
      %v212 = vld [vmem:[%s196 + $0x78] sm:$0xff]
      %v213 = vld [vmem:[%s196 + $0x80] sm:$0xff]
      %v214 = vld [vmem:[%s196 + $0x88] sm:$0x3]
      %v215 = vld [vmem:[%s196 + $0x90] sm:$0xff]
      %v216 = vld [vmem:[%s196 + $0x98] sm:$0xff]
      %v217 = vld [vmem:[%s196 + $0xa0] sm:$0x3]
      %v218 = vld [vmem:[%s196 + $0xa8] sm:$0xff]
      %v219 = vld [vmem:[%s196 + $0xb0] sm:$0xff]
      %v220 = vld [vmem:[%s196 + $0xb8] sm:$0x3]
      %v221 = vld [vmem:[%s196 + $0xc0] sm:$0xff]
      %v222 = vld [vmem:[%s196 + $0xc8] sm:$0xff]
      %v223 = vld [vmem:[%s196 + $0xd0] sm:$0x3]
      %v224 = vld [vmem:[%s196 + $0xd8] sm:$0xff]
      %v225 = vld [vmem:[%s196 + $0xe0] sm:$0xff]
      %v226 = vld [vmem:[%s196 + $0xe8] sm:$0x3]
      %v227 = vld [vmem:[%s196 + $0xf0] sm:$0xff]
      %v228 = vld [vmem:[%s196 + $0xf8] sm:$0xff]
      %v229 = vld [vmem:[%s196 + $0x100] sm:$0x3]
      %v230 = vld [vmem:[%s196 + $0x108] sm:$0xff]
      %v231 = vld [vmem:[%s196 + $0x110] sm:$0xff]
      %v232 = vld [vmem:[%s196 + $0x118] sm:$0x3]
      %v233 = vld [vmem:[%s196 + $0x120] sm:$0xff]
      %v234 = vld [vmem:[%s196 + $0x128] sm:$0xff]
      %v235 = vld [vmem:[%s196 + $0x130] sm:$0x3]
      %v236 = vld [vmem:[%s196 + $0x138] sm:$0xff]
      %v237 = vld [vmem:[%s196 + $0x140] sm:$0xff]
      %v238 = vld [vmem:[%s196 + $0x148] sm:$0x3]
      %v239 = vld [vmem:[%s196 + $0x150] sm:$0xff]
      %v240 = vld [vmem:[%s196 + $0x158] sm:$0xff]
      %v241 = vld [vmem:[%s196 + $0x160] sm:$0x3]
      %v242 = vld [vmem:[%s196 + $0x168] sm:$0xff]
      %v243 = vld [vmem:[%s196 + $0x170] sm:$0xff]
      %v244 = vld [vmem:[%s196 + $0x178] sm:$0x3]
      %v245 = vld [vmem:[%s196 + $0x180] sm:$0xff]
      %v246 = vld [vmem:[%s196 + $0x188] sm:$0xff]
      %v247 = vld [vmem:[%s196 + $0x190] sm:$0x3]
      %v248 = vld [vmem:[%s196 + $0x198] sm:$0xff]
      %v249 = vld [vmem:[%s196 + $0x1a0] sm:$0xff]
      %v250 = vld [vmem:[%s196 + $0x1a8] sm:$0x3]
      %v251 = vld [vmem:[%s1] sm:$0xff]
      %vm300 = vcmask 1046528
      %v301 = vrot.slane %v197, 1
      %v302 = vrot.slane %v198, 1
      %v303 = vsel %vm300, %v301, %v302
      %v304 = vrot.slane %v199, 1
      %v305 = vsel %vm300, %v302, %v304
      %v306 = vrot.slane %v200, 1
      %v307 = vrot.slane %v201, 1
      %v308 = vsel %vm300, %v306, %v307
      %v309 = vrot.slane %v202, 1
      %v310 = vsel %vm300, %v307, %v309
      %v311 = vrot.slane %v203, 1
      %v312 = vrot.slane %v204, 1
      %v313 = vsel %vm300, %v311, %v312
      %v314 = vrot.slane %v205, 1
      %v315 = vsel %vm300, %v312, %v314
      %v316 = vrot.slane %v206, 1
      %v317 = vrot.slane %v207, 1
      %v318 = vsel %vm300, %v316, %v317
      %v319 = vrot.slane %v208, 1
      %v320 = vsel %vm300, %v317, %v319
      %v321 = vrot.slane %v209, 1
      %v322 = vrot.slane %v210, 1
      %v323 = vsel %vm300, %v321, %v322
      %v324 = vrot.slane %v211, 1
      %v325 = vsel %vm300, %v322, %v324
      %v326 = vrot.slane %v212, 1
      %v327 = vrot.slane %v213, 1
      %v328 = vsel %vm300, %v326, %v327
      %v329 = vrot.slane %v214, 1
      %v330 = vsel %vm300, %v327, %v329
      %v331 = vrot.slane %v215, 1
      %v332 = vrot.slane %v216, 1
      %v333 = vsel %vm300, %v331, %v332
      %v334 = vrot.slane %v217, 1
      %v335 = vsel %vm300, %v332, %v334
      %v336 = vrot.slane %v218, 1
      %v337 = vrot.slane %v219, 1
      %v338 = vsel %vm300, %v336, %v337
      %v339 = vrot.slane %v220, 1
      %v340 = vsel %vm300, %v337, %v339
      %v341 = vrot.slane %v221, 1
      %v342 = vrot.slane %v222, 1
      %v343 = vsel %vm300, %v341, %v342
      %v344 = vrot.slane %v223, 1
      %v345 = vsel %vm300, %v342, %v344
      %v346 = vrot.slane %v224, 1
      %v347 = vrot.slane %v225, 1
      %v348 = vsel %vm300, %v346, %v347
      %v349 = vrot.slane %v226, 1
      %v350 = vsel %vm300, %v347, %v349
      %v351 = vrot.slane %v227, 1
      %v352 = vrot.slane %v228, 1
      %v353 = vsel %vm300, %v351, %v352
      %v354 = vrot.slane %v229, 1
      %v355 = vsel %vm300, %v352, %v354
      %v356 = vrot.slane %v230, 1
      %v357 = vrot.slane %v231, 1
      %v358 = vsel %vm300, %v356, %v357
      %v359 = vrot.slane %v232, 1
      %v360 = vsel %vm300, %v357, %v359
      %v361 = vrot.slane %v233, 1
      %v362 = vrot.slane %v234, 1
      %v363 = vsel %vm300, %v361, %v362
      %v364 = vrot.slane %v235, 1
      %v365 = vsel %vm300, %v362, %v364
      %v366 = vrot.slane %v236, 1
      %v367 = vrot.slane %v237, 1
      %v368 = vsel %vm300, %v366, %v367
      %v369 = vrot.slane %v238, 1
      %v370 = vsel %vm300, %v367, %v369
      %v371 = vrot.slane %v239, 1
      %v372 = vrot.slane %v240, 1
      %v373 = vsel %vm300, %v371, %v372
      %v374 = vrot.slane %v241, 1
      %v375 = vsel %vm300, %v372, %v374
      %v376 = vrot.slane %v242, 1
      %v377 = vrot.slane %v243, 1
      %v378 = vsel %vm300, %v376, %v377
      %v379 = vrot.slane %v244, 1
      %v380 = vsel %vm300, %v377, %v379
      %s381 = scalar_lea.vmem %s1, 8
      %v382 = vld [vmem:[%s381] sm:$0xff]
      %vm383 = vcmask 31744
      %v385 = vsel %vm383, %v382, 0
      %v387 = vsel %vm383, %v303, 0
      %v389 = vsel %vm383, %v305, 0
      %v391 = vsel %vm383, %v308, 0
      %v393 = vsel %vm383, %v310, 0
      %v395 = vsel %vm383, %v313, 0
      %v397 = vsel %vm383, %v315, 0
      %v399 = vsel %vm383, %v318, 0
      %v401 = vsel %vm383, %v320, 0
      %v403 = vsel %vm383, %v323, 0
      %v405 = vsel %vm383, %v325, 0
      %v407 = vsel %vm383, %v328, 0
      %v409 = vsel %vm383, %v330, 0
      %v411 = vsel %vm383, %v333, 0
      %v413 = vsel %vm383, %v335, 0
      %v415 = vsel %vm383, %v338, 0
      %v417 = vsel %vm383, %v340, 0
      %v419 = vsel %vm383, %v343, 0
      %v421 = vsel %vm383, %v345, 0
      %v423 = vsel %vm383, %v348, 0
      %v425 = vsel %vm383, %v350, 0
      %v427 = vsel %vm383, %v353, 0
      %v429 = vsel %vm383, %v355, 0
      %v431 = vsel %vm383, %v358, 0
      %v433 = vsel %vm383, %v360, 0
      %v435 = vsel %vm383, %v363, 0
      %v437 = vsel %vm383, %v365, 0
      %v439 = vsel %vm383, %v368, 0
      %v441 = vsel %vm383, %v370, 0
      %v443 = vsel %vm383, %v373, 0
      %v445 = vsel %vm383, %v375, 0
      %v447 = vsel %vm383, %v378, 0
      %v449 = vsel %vm383, %v380, 0
      %451 = vmatprep.subr.mxu0 0.0
      %452 = vmatpush1.xpose.msra.mxu0 %v387
      %453 = vmatprep.subr.mxu0 0.0
      %454 = vmatpush1.xpose.msra.mxu0 %v389
      %455 = vmatprep.subr.mxu0 0.0
      %456 = vmatpush1.xpose.msra.mxu0 %v391
      %457 = vmatprep.subr.mxu0 0.0
      %458 = vmatpush1.xpose.msra.mxu0 %v393
      %459 = vmatprep.subr.mxu0 0.0
      %460 = vmatpush1.xpose.msra.mxu0 %v395
      %461 = vmatprep.subr.mxu0 0.0
      %462 = vmatpush1.xpose.msra.mxu0 %v397
      %463 = vmatprep.subr.mxu0 0.0
      %464 = vmatpush1.xpose.msra.mxu0 %v399
      %465 = vmatprep.subr.mxu0 0.0
      %466 = vmatpush1.xpose.msra.mxu0 %v401
      %467 = vmatprep.subr.mxu0 0.0
      %468 = vmatpush1.xpose.msra.mxu0 %v403
      %469 = vmatprep.subr.mxu0 0.0
      %470 = vmatpush1.xpose.msra.mxu0 %v405
      %471 = vmatprep.subr.mxu0 0.0
      %472 = vmatpush1.xpose.msra.mxu0 %v407
      %473 = vmatprep.subr.mxu0 0.0
      %474 = vmatpush1.xpose.msra.mxu0 %v409
      %475 = vmatprep.subr.mxu0 0.0
      %476 = vmatpush1.xpose.msra.mxu0 %v411
      %477 = vmatprep.subr.mxu0 0.0
      %478 = vmatpush1.xpose.msra.mxu0 %v413
      %479 = vmatprep.subr.mxu0 0.0
      %480 = vmatpush1.xpose.msra.mxu0 %v415
      %481 = vmatprep.subr.mxu0 0.0
      %482 = vmatpush1.xpose.msra.mxu0 %v417
      %483 = vmatprep.subr.mxu0 0.0
      %484 = vmatpush1.xpose.msra.mxu0 %v419
      %485 = vmatprep.subr.mxu0 0.0
      %486 = vmatpush1.xpose.msra.mxu0 %v421
      %487 = vmatprep.subr.mxu0 0.0
      %488 = vmatpush1.xpose.msra.mxu0 %v423
      %489 = vmatprep.subr.mxu0 0.0
      %490 = vmatpush1.xpose.msra.mxu0 %v425
      %491 = vmatprep.subr.mxu0 0.0
      %492 = vmatpush1.xpose.msra.mxu0 %v427
      %493 = vmatprep.subr.mxu0 0.0
      %494 = vmatpush1.xpose.msra.mxu0 %v429
      %495 = vmatprep.subr.mxu0 0.0
      %496 = vmatpush1.xpose.msra.mxu0 %v431
      %497 = vmatprep.subr.mxu0 0.0
      %498 = vmatpush1.xpose.msra.mxu0 %v433
      %499 = vmatprep.subr.mxu0 0.0
      %500 = vmatpush1.xpose.msra.mxu0 %v435
      %501 = vmatprep.subr.mxu0 0.0
      %502 = vmatpush1.xpose.msra.mxu0 %v437
      %503 = vmatprep.subr.mxu0 0.0
      %504 = vmatpush1.xpose.msra.mxu0 %v439
      %505 = vmatprep.subr.mxu0 0.0
      %506 = vmatpush1.xpose.msra.mxu0 %v441
      %507 = vmatprep.subr.mxu0 0.0
      %508 = vmatpush1.xpose.msra.mxu0 %v443
      %509 = vmatprep.subr.mxu0 0.0
      %510 = vmatpush1.xpose.msra.mxu0 %v445
      %511 = vmatprep.subr.mxu0 0.0
      %512 = vmatpush1.xpose.msra.mxu0 %v447
      %513 = vmatprep.subr.mxu0 0.0
      %514 = vmatpush1.xpose.msra.mxu0 %v449
      %515 = vmatprep.mubr.f32.mxu0 0.0
      %516 = vmatmul.mubr.f32.gmra.mrb[0].mxu0 %v385
      %v517 = vpop.f32.mrb[0].mxu0
      %v518 = vadd.f32 0.0, %v517
      %v519 = vpop.f32.mrb[0].mxu0
      %v520 = vadd.f32 0.0, %v519
      %521 = vdwg.mxu0
      %v523 = vsel %vm383, %v251, 0
      %v525 = vsel %vm383, %v197, 0
      %v527 = vsel %vm383, %v198, 0
      %v529 = vsel %vm383, %v200, 0
      %v531 = vsel %vm383, %v201, 0
      %v533 = vsel %vm383, %v203, 0
      %v535 = vsel %vm383, %v204, 0
      %v537 = vsel %vm383, %v206, 0
      %v539 = vsel %vm383, %v207, 0
      %v541 = vsel %vm383, %v209, 0
      %v543 = vsel %vm383, %v210, 0
      %v545 = vsel %vm383, %v212, 0
      %v547 = vsel %vm383, %v213, 0
      %v549 = vsel %vm383, %v215, 0
      %v551 = vsel %vm383, %v216, 0
      %v553 = vsel %vm383, %v218, 0
      %v555 = vsel %vm383, %v219, 0
      %v557 = vsel %vm383, %v221, 0
      %v559 = vsel %vm383, %v222, 0
      %v561 = vsel %vm383, %v224, 0
      %v563 = vsel %vm383, %v225, 0
      %v565 = vsel %vm383, %v227, 0
      %v567 = vsel %vm383, %v228, 0
      %v569 = vsel %vm383, %v230, 0
      %v571 = vsel %vm383, %v231, 0
      %v573 = vsel %vm383, %v233, 0
      %v575 = vsel %vm383, %v234, 0
      %v577 = vsel %vm383, %v236, 0
      %v579 = vsel %vm383, %v237, 0
      %v581 = vsel %vm383, %v239, 0
      %v583 = vsel %vm383, %v240, 0
      %v585 = vsel %vm383, %v242, 0
      %v587 = vsel %vm383, %v243, 0
      %589 = vmatprep.subr.mxu0 0.0
      %590 = vmatpush1.xpose.msra.mxu0 %v525
      %591 = vmatprep.subr.mxu0 0.0
      %592 = vmatpush1.xpose.msra.mxu0 %v527
      %593 = vmatprep.subr.mxu0 0.0
      %594 = vmatpush1.xpose.msra.mxu0 %v529
      %595 = vmatprep.subr.mxu0 0.0
      %596 = vmatpush1.xpose.msra.mxu0 %v531
      %597 = vmatprep.subr.mxu0 0.0
      %598 = vmatpush1.xpose.msra.mxu0 %v533
      %599 = vmatprep.subr.mxu0 0.0
      %600 = vmatpush1.xpose.msra.mxu0 %v535
      %601 = vmatprep.subr.mxu0 0.0
      %602 = vmatpush1.xpose.msra.mxu0 %v537
      %603 = vmatprep.subr.mxu0 0.0
      %604 = vmatpush1.xpose.msra.mxu0 %v539
      %605 = vmatprep.subr.mxu0 0.0
      %606 = vmatpush1.xpose.msra.mxu0 %v541
      %607 = vmatprep.subr.mxu0 0.0
      %608 = vmatpush1.xpose.msra.mxu0 %v543
      %609 = vmatprep.subr.mxu0 0.0
      %610 = vmatpush1.xpose.msra.mxu0 %v545
      %611 = vmatprep.subr.mxu0 0.0
      %612 = vmatpush1.xpose.msra.mxu0 %v547
      %613 = vmatprep.subr.mxu0 0.0
      %614 = vmatpush1.xpose.msra.mxu0 %v549
      %615 = vmatprep.subr.mxu0 0.0
      %616 = vmatpush1.xpose.msra.mxu0 %v551
      %617 = vmatprep.subr.mxu0 0.0
      %618 = vmatpush1.xpose.msra.mxu0 %v553
      %619 = vmatprep.subr.mxu0 0.0
      %620 = vmatpush1.xpose.msra.mxu0 %v555
      %621 = vmatprep.subr.mxu0 0.0
      %622 = vmatpush1.xpose.msra.mxu0 %v557
      %623 = vmatprep.subr.mxu0 0.0
      %624 = vmatpush1.xpose.msra.mxu0 %v559
      %625 = vmatprep.subr.mxu0 0.0
      %626 = vmatpush1.xpose.msra.mxu0 %v561
      %627 = vmatprep.subr.mxu0 0.0
      %628 = vmatpush1.xpose.msra.mxu0 %v563
      %629 = vmatprep.subr.mxu0 0.0
      %630 = vmatpush1.xpose.msra.mxu0 %v565
      %631 = vmatprep.subr.mxu0 0.0
      %632 = vmatpush1.xpose.msra.mxu0 %v567
      %633 = vmatprep.subr.mxu0 0.0
      %634 = vmatpush1.xpose.msra.mxu0 %v569
      %635 = vmatprep.subr.mxu0 0.0
      %636 = vmatpush1.xpose.msra.mxu0 %v571
      %637 = vmatprep.subr.mxu0 0.0
      %638 = vmatpush1.xpose.msra.mxu0 %v573
      %639 = vmatprep.subr.mxu0 0.0
      %640 = vmatpush1.xpose.msra.mxu0 %v575
      %641 = vmatprep.subr.mxu0 0.0
      %642 = vmatpush1.xpose.msra.mxu0 %v577
      %643 = vmatprep.subr.mxu0 0.0
      %644 = vmatpush1.xpose.msra.mxu0 %v579
      %645 = vmatprep.subr.mxu0 0.0
      %646 = vmatpush1.xpose.msra.mxu0 %v581
      %647 = vmatprep.subr.mxu0 0.0
      %648 = vmatpush1.xpose.msra.mxu0 %v583
      %649 = vmatprep.subr.mxu0 0.0
      %650 = vmatpush1.xpose.msra.mxu0 %v585
      %651 = vmatprep.subr.mxu0 0.0
      %652 = vmatpush1.xpose.msra.mxu0 %v587
      %653 = vmatprep.mubr.f32.mxu0 0.0
      %654 = vmatmul.mubr.f32.gmra.mrb[0].mxu0 %v523
      %v655 = vpop.f32.mrb[0].mxu0
      %v656 = vadd.f32 %v518, %v655
      %v657 = vpop.f32.mrb[0].mxu0
      %v658 = vadd.f32 %v520, %v657
      %659 = vdwg.mxu0
      %vm660 = vcmask 1045504
      %v661 = vrot.slane %v197, 2
      %v662 = vrot.slane %v198, 2
      %v663 = vsel %vm660, %v661, %v662
      %v664 = vrot.slane %v199, 2
      %v665 = vsel %vm660, %v662, %v664
      %v666 = vrot.slane %v200, 2
      %v667 = vrot.slane %v201, 2
      %v668 = vsel %vm660, %v666, %v667
      %v669 = vrot.slane %v202, 2
      %v670 = vsel %vm660, %v667, %v669
      %v671 = vrot.slane %v203, 2
      %v672 = vrot.slane %v204, 2
      %v673 = vsel %vm660, %v671, %v672
      %v674 = vrot.slane %v205, 2
      %v675 = vsel %vm660, %v672, %v674
      %v676 = vrot.slane %v206, 2
      %v677 = vrot.slane %v207, 2
      %v678 = vsel %vm660, %v676, %v677
      %v679 = vrot.slane %v208, 2
      %v680 = vsel %vm660, %v677, %v679
      %v681 = vrot.slane %v209, 2
      %v682 = vrot.slane %v210, 2
      %v683 = vsel %vm660, %v681, %v682
      %v684 = vrot.slane %v211, 2
      %v685 = vsel %vm660, %v682, %v684
      %v686 = vrot.slane %v212, 2
      %v687 = vrot.slane %v213, 2
      %v688 = vsel %vm660, %v686, %v687
      %v689 = vrot.slane %v214, 2
      %v690 = vsel %vm660, %v687, %v689
      %v691 = vrot.slane %v215, 2
      %v692 = vrot.slane %v216, 2
      %v693 = vsel %vm660, %v691, %v692
      %v694 = vrot.slane %v217, 2
      %v695 = vsel %vm660, %v692, %v694
      %v696 = vrot.slane %v218, 2
      %v697 = vrot.slane %v219, 2
      %v698 = vsel %vm660, %v696, %v697
      %v699 = vrot.slane %v220, 2
      %v700 = vsel %vm660, %v697, %v699
      %v701 = vrot.slane %v221, 2
      %v702 = vrot.slane %v222, 2
      %v703 = vsel %vm660, %v701, %v702
      %v704 = vrot.slane %v223, 2
      %v705 = vsel %vm660, %v702, %v704
      %v706 = vrot.slane %v224, 2
      %v707 = vrot.slane %v225, 2
      %v708 = vsel %vm660, %v706, %v707
      %v709 = vrot.slane %v226, 2
      %v710 = vsel %vm660, %v707, %v709
      %v711 = vrot.slane %v227, 2
      %v712 = vrot.slane %v228, 2
      %v713 = vsel %vm660, %v711, %v712
      %v714 = vrot.slane %v229, 2
      %v715 = vsel %vm660, %v712, %v714
      %v716 = vrot.slane %v230, 2
      %v717 = vrot.slane %v231, 2
      %v718 = vsel %vm660, %v716, %v717
      %v719 = vrot.slane %v232, 2
      %v720 = vsel %vm660, %v717, %v719
      %v721 = vrot.slane %v233, 2
      %v722 = vrot.slane %v234, 2
      %v723 = vsel %vm660, %v721, %v722
      %v724 = vrot.slane %v235, 2
      %v725 = vsel %vm660, %v722, %v724
      %v726 = vrot.slane %v236, 2
      %v727 = vrot.slane %v237, 2
      %v728 = vsel %vm660, %v726, %v727
      %v729 = vrot.slane %v238, 2
      %v730 = vsel %vm660, %v727, %v729
      %v731 = vrot.slane %v239, 2
      %v732 = vrot.slane %v240, 2
      %v733 = vsel %vm660, %v731, %v732
      %v734 = vrot.slane %v241, 2
      %v735 = vsel %vm660, %v732, %v734
      %v736 = vrot.slane %v242, 2
      %v737 = vrot.slane %v243, 2
      %v738 = vsel %vm660, %v736, %v737
      %v739 = vrot.slane %v244, 2
      %v740 = vsel %vm660, %v737, %v739
      %s741 = scalar_lea.vmem %s1, 16
      %v742 = vld [vmem:[%s741] sm:$0xff]
      %v744 = vsel %vm383, %v742, 0
      %v746 = vsel %vm383, %v663, 0
      %v748 = vsel %vm383, %v665, 0
      %v750 = vsel %vm383, %v668, 0
      %v752 = vsel %vm383, %v670, 0
      %v754 = vsel %vm383, %v673, 0
      %v756 = vsel %vm383, %v675, 0
      %v758 = vsel %vm383, %v678, 0
      %v760 = vsel %vm383, %v680, 0
      %v762 = vsel %vm383, %v683, 0
      %v764 = vsel %vm383, %v685, 0
      %v766 = vsel %vm383, %v688, 0
      %v768 = vsel %vm383, %v690, 0
      %v770 = vsel %vm383, %v693, 0
      %v772 = vsel %vm383, %v695, 0
      %v774 = vsel %vm383, %v698, 0
      %v776 = vsel %vm383, %v700, 0
      %v778 = vsel %vm383, %v703, 0
      %v780 = vsel %vm383, %v705, 0
      %v782 = vsel %vm383, %v708, 0
      %v784 = vsel %vm383, %v710, 0
      %v786 = vsel %vm383, %v713, 0
      %v788 = vsel %vm383, %v715, 0
      %v790 = vsel %vm383, %v718, 0
      %v792 = vsel %vm383, %v720, 0
      %v794 = vsel %vm383, %v723, 0
      %v796 = vsel %vm383, %v725, 0
      %v798 = vsel %vm383, %v728, 0
      %v800 = vsel %vm383, %v730, 0
      %v802 = vsel %vm383, %v733, 0
      %v804 = vsel %vm383, %v735, 0
      %v806 = vsel %vm383, %v738, 0
      %v808 = vsel %vm383, %v740, 0
      %810 = vmatprep.subr.mxu0 0.0
      %811 = vmatpush1.xpose.msra.mxu0 %v746
      %812 = vmatprep.subr.mxu0 0.0
      %813 = vmatpush1.xpose.msra.mxu0 %v748
      %814 = vmatprep.subr.mxu0 0.0
      %815 = vmatpush1.xpose.msra.mxu0 %v750
      %816 = vmatprep.subr.mxu0 0.0
      %817 = vmatpush1.xpose.msra.mxu0 %v752
      %818 = vmatprep.subr.mxu0 0.0
      %819 = vmatpush1.xpose.msra.mxu0 %v754
      %820 = vmatprep.subr.mxu0 0.0
      %821 = vmatpush1.xpose.msra.mxu0 %v756
      %822 = vmatprep.subr.mxu0 0.0
      %823 = vmatpush1.xpose.msra.mxu0 %v758
      %824 = vmatprep.subr.mxu0 0.0
      %825 = vmatpush1.xpose.msra.mxu0 %v760
      %826 = vmatprep.subr.mxu0 0.0
      %827 = vmatpush1.xpose.msra.mxu0 %v762
      %828 = vmatprep.subr.mxu0 0.0
      %829 = vmatpush1.xpose.msra.mxu0 %v764
      %830 = vmatprep.subr.mxu0 0.0
      %831 = vmatpush1.xpose.msra.mxu0 %v766
      %832 = vmatprep.subr.mxu0 0.0
      %833 = vmatpush1.xpose.msra.mxu0 %v768
      %834 = vmatprep.subr.mxu0 0.0
      %835 = vmatpush1.xpose.msra.mxu0 %v770
      %836 = vmatprep.subr.mxu0 0.0
      %837 = vmatpush1.xpose.msra.mxu0 %v772
      %838 = vmatprep.subr.mxu0 0.0
      %839 = vmatpush1.xpose.msra.mxu0 %v774
      %840 = vmatprep.subr.mxu0 0.0
      %841 = vmatpush1.xpose.msra.mxu0 %v776
      %842 = vmatprep.subr.mxu0 0.0
      %843 = vmatpush1.xpose.msra.mxu0 %v778
      %844 = vmatprep.subr.mxu0 0.0
      %845 = vmatpush1.xpose.msra.mxu0 %v780
      %846 = vmatprep.subr.mxu0 0.0
      %847 = vmatpush1.xpose.msra.mxu0 %v782
      %848 = vmatprep.subr.mxu0 0.0
      %849 = vmatpush1.xpose.msra.mxu0 %v784
      %850 = vmatprep.subr.mxu0 0.0
      %851 = vmatpush1.xpose.msra.mxu0 %v786
      %852 = vmatprep.subr.mxu0 0.0
      %853 = vmatpush1.xpose.msra.mxu0 %v788
      %854 = vmatprep.subr.mxu0 0.0
      %855 = vmatpush1.xpose.msra.mxu0 %v790
      %856 = vmatprep.subr.mxu0 0.0
      %857 = vmatpush1.xpose.msra.mxu0 %v792
      %858 = vmatprep.subr.mxu0 0.0
      %859 = vmatpush1.xpose.msra.mxu0 %v794
      %860 = vmatprep.subr.mxu0 0.0
      %861 = vmatpush1.xpose.msra.mxu0 %v796
      %862 = vmatprep.subr.mxu0 0.0
      %863 = vmatpush1.xpose.msra.mxu0 %v798
      %864 = vmatprep.subr.mxu0 0.0
      %865 = vmatpush1.xpose.msra.mxu0 %v800
      %866 = vmatprep.subr.mxu0 0.0
      %867 = vmatpush1.xpose.msra.mxu0 %v802
      %868 = vmatprep.subr.mxu0 0.0
      %869 = vmatpush1.xpose.msra.mxu0 %v804
      %870 = vmatprep.subr.mxu0 0.0
      %871 = vmatpush1.xpose.msra.mxu0 %v806
      %872 = vmatprep.subr.mxu0 0.0
      %873 = vmatpush1.xpose.msra.mxu0 %v808
      %874 = vmatprep.mubr.f32.mxu0 0.0
      %875 = vmatmul.mubr.f32.gmra.mrb[0].mxu0 %v744
      %v876 = vpop.f32.mrb[0].mxu0
      %v877 = vadd.f32 0.0, %v876
      %v878 = vpop.f32.mrb[0].mxu0
      %v879 = vadd.f32 0.0, %v878
      %880 = vdwg.mxu0
      %v881 = vadd.f32 %v656, %v877
      %v882 = vadd.f32 %v658, %v879
      %s883 = scalar_lea.vmem %s1, 24
      %v884 = vld [vmem:[%s883] sm:$0xff]
      %v886 = vsel %vm383, %v884, 0
      %v889 = vsel %vm383, %v245, 0
      %v892 = vsel %vm383, %v246, 0
      %894 = vmatprep.subr.mxu0 0.0
      %895 = vmatpush1.xpose.msra.mxu0 %v529
      %896 = vmatprep.subr.mxu0 0.0
      %897 = vmatpush1.xpose.msra.mxu0 %v531
      %898 = vmatprep.subr.mxu0 0.0
      %899 = vmatpush1.xpose.msra.mxu0 %v533
      %900 = vmatprep.subr.mxu0 0.0
      %901 = vmatpush1.xpose.msra.mxu0 %v535
      %902 = vmatprep.subr.mxu0 0.0
      %903 = vmatpush1.xpose.msra.mxu0 %v537
      %904 = vmatprep.subr.mxu0 0.0
      %905 = vmatpush1.xpose.msra.mxu0 %v539
      %906 = vmatprep.subr.mxu0 0.0
      %907 = vmatpush1.xpose.msra.mxu0 %v541
      %908 = vmatprep.subr.mxu0 0.0
      %909 = vmatpush1.xpose.msra.mxu0 %v543
      %910 = vmatprep.subr.mxu0 0.0
      %911 = vmatpush1.xpose.msra.mxu0 %v545
      %912 = vmatprep.subr.mxu0 0.0
      %913 = vmatpush1.xpose.msra.mxu0 %v547
      %914 = vmatprep.subr.mxu0 0.0
      %915 = vmatpush1.xpose.msra.mxu0 %v549
      %916 = vmatprep.subr.mxu0 0.0
      %917 = vmatpush1.xpose.msra.mxu0 %v551
      %918 = vmatprep.subr.mxu0 0.0
      %919 = vmatpush1.xpose.msra.mxu0 %v553
      %920 = vmatprep.subr.mxu0 0.0
      %921 = vmatpush1.xpose.msra.mxu0 %v555
      %922 = vmatprep.subr.mxu0 0.0
      %923 = vmatpush1.xpose.msra.mxu0 %v557
      %924 = vmatprep.subr.mxu0 0.0
      %925 = vmatpush1.xpose.msra.mxu0 %v559
      %926 = vmatprep.subr.mxu0 0.0
      %927 = vmatpush1.xpose.msra.mxu0 %v561
      %928 = vmatprep.subr.mxu0 0.0
      %929 = vmatpush1.xpose.msra.mxu0 %v563
      %930 = vmatprep.subr.mxu0 0.0
      %931 = vmatpush1.xpose.msra.mxu0 %v565
      %932 = vmatprep.subr.mxu0 0.0
      %933 = vmatpush1.xpose.msra.mxu0 %v567
      %934 = vmatprep.subr.mxu0 0.0
      %935 = vmatpush1.xpose.msra.mxu0 %v569
      %936 = vmatprep.subr.mxu0 0.0
      %937 = vmatpush1.xpose.msra.mxu0 %v571
      %938 = vmatprep.subr.mxu0 0.0
      %939 = vmatpush1.xpose.msra.mxu0 %v573
      %940 = vmatprep.subr.mxu0 0.0
      %941 = vmatpush1.xpose.msra.mxu0 %v575
      %942 = vmatprep.subr.mxu0 0.0
      %943 = vmatpush1.xpose.msra.mxu0 %v577
      %944 = vmatprep.subr.mxu0 0.0
      %945 = vmatpush1.xpose.msra.mxu0 %v579
      %946 = vmatprep.subr.mxu0 0.0
      %947 = vmatpush1.xpose.msra.mxu0 %v581
      %948 = vmatprep.subr.mxu0 0.0
      %949 = vmatpush1.xpose.msra.mxu0 %v583
      %950 = vmatprep.subr.mxu0 0.0
      %951 = vmatpush1.xpose.msra.mxu0 %v585
      %952 = vmatprep.subr.mxu0 0.0
      %953 = vmatpush1.xpose.msra.mxu0 %v587
      %954 = vmatprep.subr.mxu0 0.0
      %955 = vmatpush1.xpose.msra.mxu0 %v889
      %956 = vmatprep.subr.mxu0 0.0
      %957 = vmatpush1.xpose.msra.mxu0 %v892
      %958 = vmatprep.mubr.f32.mxu0 0.0
      %959 = vmatmul.mubr.f32.gmra.mrb[0].mxu0 %v886
      %v960 = vpop.f32.mrb[0].mxu0
      %v961 = vadd.f32 0.0, %v960
      %v962 = vpop.f32.mrb[0].mxu0
      %v963 = vadd.f32 0.0, %v962
      %964 = vdwg.mxu0
      %v965 = vadd.f32 %v881, %v961
      %v966 = vadd.f32 %v882, %v963
      %v968 = vrot.slane %v245, 1
      %v969 = vrot.slane %v246, 1
      %v970 = vsel %vm300, %v968, %v969
      %v971 = vrot.slane %v247, 1
      %v972 = vsel %vm300, %v969, %v971
      %s973 = scalar_lea.vmem %s1, 32
      %v974 = vld [vmem:[%s973] sm:$0xff]
      %v976 = vsel %vm383, %v974, 0
      %v978 = vsel %vm383, %v970, 0
      %v980 = vsel %vm383, %v972, 0
      %982 = vmatprep.subr.mxu0 0.0
      %983 = vmatpush1.xpose.msra.mxu0 %v391
      %984 = vmatprep.subr.mxu0 0.0
      %985 = vmatpush1.xpose.msra.mxu0 %v393
      %986 = vmatprep.subr.mxu0 0.0
      %987 = vmatpush1.xpose.msra.mxu0 %v395
      %988 = vmatprep.subr.mxu0 0.0
      %989 = vmatpush1.xpose.msra.mxu0 %v397
      %990 = vmatprep.subr.mxu0 0.0
      %991 = vmatpush1.xpose.msra.mxu0 %v399
      %992 = vmatprep.subr.mxu0 0.0
      %993 = vmatpush1.xpose.msra.mxu0 %v401
      %994 = vmatprep.subr.mxu0 0.0
      %995 = vmatpush1.xpose.msra.mxu0 %v403
      %996 = vmatprep.subr.mxu0 0.0
      %997 = vmatpush1.xpose.msra.mxu0 %v405
      %998 = vmatprep.subr.mxu0 0.0
      %999 = vmatpush1.xpose.msra.mxu0 %v407
      %1000 = vmatprep.subr.mxu0 0.0
      %1001 = vmatpush1.xpose.msra.mxu0 %v409
      %1002 = vmatprep.subr.mxu0 0.0
      %1003 = vmatpush1.xpose.msra.mxu0 %v411
      %1004 = vmatprep.subr.mxu0 0.0
      %1005 = vmatpush1.xpose.msra.mxu0 %v413
      %1006 = vmatprep.subr.mxu0 0.0
      %1007 = vmatpush1.xpose.msra.mxu0 %v415
      %1008 = vmatprep.subr.mxu0 0.0
      %1009 = vmatpush1.xpose.msra.mxu0 %v417
      %1010 = vmatprep.subr.mxu0 0.0
      %1011 = vmatpush1.xpose.msra.mxu0 %v419
      %1012 = vmatprep.subr.mxu0 0.0
      %1013 = vmatpush1.xpose.msra.mxu0 %v421
      %1014 = vmatprep.subr.mxu0 0.0
      %1015 = vmatpush1.xpose.msra.mxu0 %v423
      %1016 = vmatprep.subr.mxu0 0.0
      %1017 = vmatpush1.xpose.msra.mxu0 %v425
      %1018 = vmatprep.subr.mxu0 0.0
      %1019 = vmatpush1.xpose.msra.mxu0 %v427
      %1020 = vmatprep.subr.mxu0 0.0
      %1021 = vmatpush1.xpose.msra.mxu0 %v429
      %1022 = vmatprep.subr.mxu0 0.0
      %1023 = vmatpush1.xpose.msra.mxu0 %v431
      %1024 = vmatprep.subr.mxu0 0.0
      %1025 = vmatpush1.xpose.msra.mxu0 %v433
      %1026 = vmatprep.subr.mxu0 0.0
      %1027 = vmatpush1.xpose.msra.mxu0 %v435
      %1028 = vmatprep.subr.mxu0 0.0
      %1029 = vmatpush1.xpose.msra.mxu0 %v437
      %1030 = vmatprep.subr.mxu0 0.0
      %1031 = vmatpush1.xpose.msra.mxu0 %v439
      %1032 = vmatprep.subr.mxu0 0.0
      %1033 = vmatpush1.xpose.msra.mxu0 %v441
      %1034 = vmatprep.subr.mxu0 0.0
      %1035 = vmatpush1.xpose.msra.mxu0 %v443
      %1036 = vmatprep.subr.mxu0 0.0
      %1037 = vmatpush1.xpose.msra.mxu0 %v445
      %1038 = vmatprep.subr.mxu0 0.0
      %1039 = vmatpush1.xpose.msra.mxu0 %v447
      %1040 = vmatprep.subr.mxu0 0.0
      %1041 = vmatpush1.xpose.msra.mxu0 %v449
      %1042 = vmatprep.subr.mxu0 0.0
      %1043 = vmatpush1.xpose.msra.mxu0 %v978
      %1044 = vmatprep.subr.mxu0 0.0
      %1045 = vmatpush1.xpose.msra.mxu0 %v980
      %1046 = vmatprep.mubr.f32.mxu0 0.0
      %1047 = vmatmul.mubr.f32.gmra.mrb[0].mxu0 %v976
      %v1048 = vpop.f32.mrb[0].mxu0
      %v1049 = vadd.f32 0.0, %v1048
      %v1050 = vpop.f32.mrb[0].mxu0
      %v1051 = vadd.f32 0.0, %v1050
      %1052 = vdwg.mxu0
      %v1053 = vadd.f32 %v965, %v1049
      %v1054 = vadd.f32 %v966, %v1051
      %v1055 = vrot.slane %v245, 2
      %v1056 = vrot.slane %v246, 2
      %v1057 = vsel %vm660, %v1055, %v1056
      %v1058 = vrot.slane %v247, 2
      %v1059 = vsel %vm660, %v1056, %v1058
      %s1060 = scalar_lea.vmem %s1, 40
      %v1061 = vld [vmem:[%s1060] sm:$0xff]
      %v1063 = vsel %vm383, %v1061, 0
      %v1065 = vsel %vm383, %v1057, 0
      %v1067 = vsel %vm383, %v1059, 0
      %1069 = vmatprep.subr.mxu0 0.0
      %1070 = vmatpush1.xpose.msra.mxu0 %v750
      %1071 = vmatprep.subr.mxu0 0.0
      %1072 = vmatpush1.xpose.msra.mxu0 %v752
      %1073 = vmatprep.subr.mxu0 0.0
      %1074 = vmatpush1.xpose.msra.mxu0 %v754
      %1075 = vmatprep.subr.mxu0 0.0
      %1076 = vmatpush1.xpose.msra.mxu0 %v756
      %1077 = vmatprep.subr.mxu0 0.0
      %1078 = vmatpush1.xpose.msra.mxu0 %v758
      %1079 = vmatprep.subr.mxu0 0.0
      %1080 = vmatpush1.xpose.msra.mxu0 %v760
      %1081 = vmatprep.subr.mxu0 0.0
      %1082 = vmatpush1.xpose.msra.mxu0 %v762
      %1083 = vmatprep.subr.mxu0 0.0
      %1084 = vmatpush1.xpose.msra.mxu0 %v764
      %1085 = vmatprep.subr.mxu0 0.0
      %1086 = vmatpush1.xpose.msra.mxu0 %v766
      %1087 = vmatprep.subr.mxu0 0.0
      %1088 = vmatpush1.xpose.msra.mxu0 %v768
      %1089 = vmatprep.subr.mxu0 0.0
      %1090 = vmatpush1.xpose.msra.mxu0 %v770
      %1091 = vmatprep.subr.mxu0 0.0
      %1092 = vmatpush1.xpose.msra.mxu0 %v772
      %1093 = vmatprep.subr.mxu0 0.0
      %1094 = vmatpush1.xpose.msra.mxu0 %v774
      %1095 = vmatprep.subr.mxu0 0.0
      %1096 = vmatpush1.xpose.msra.mxu0 %v776
      %1097 = vmatprep.subr.mxu0 0.0
      %1098 = vmatpush1.xpose.msra.mxu0 %v778
      %1099 = vmatprep.subr.mxu0 0.0
      %1100 = vmatpush1.xpose.msra.mxu0 %v780
      %1101 = vmatprep.subr.mxu0 0.0
      %1102 = vmatpush1.xpose.msra.mxu0 %v782
      %1103 = vmatprep.subr.mxu0 0.0
      %1104 = vmatpush1.xpose.msra.mxu0 %v784
      %1105 = vmatprep.subr.mxu0 0.0
      %1106 = vmatpush1.xpose.msra.mxu0 %v786
      %1107 = vmatprep.subr.mxu0 0.0
      %1108 = vmatpush1.xpose.msra.mxu0 %v788
      %1109 = vmatprep.subr.mxu0 0.0
      %1110 = vmatpush1.xpose.msra.mxu0 %v790
      %1111 = vmatprep.subr.mxu0 0.0
      %1112 = vmatpush1.xpose.msra.mxu0 %v792
      %1113 = vmatprep.subr.mxu0 0.0
      %1114 = vmatpush1.xpose.msra.mxu0 %v794
      %1115 = vmatprep.subr.mxu0 0.0
      %1116 = vmatpush1.xpose.msra.mxu0 %v796
      %1117 = vmatprep.subr.mxu0 0.0
      %1118 = vmatpush1.xpose.msra.mxu0 %v798
      %1119 = vmatprep.subr.mxu0 0.0
      %1120 = vmatpush1.xpose.msra.mxu0 %v800
      %1121 = vmatprep.subr.mxu0 0.0
      %1122 = vmatpush1.xpose.msra.mxu0 %v802
      %1123 = vmatprep.subr.mxu0 0.0
      %1124 = vmatpush1.xpose.msra.mxu0 %v804
      %1125 = vmatprep.subr.mxu0 0.0
      %1126 = vmatpush1.xpose.msra.mxu0 %v806
      %1127 = vmatprep.subr.mxu0 0.0
      %1128 = vmatpush1.xpose.msra.mxu0 %v808
      %1129 = vmatprep.subr.mxu0 0.0
      %1130 = vmatpush1.xpose.msra.mxu0 %v1065
      %1131 = vmatprep.subr.mxu0 0.0
      %1132 = vmatpush1.xpose.msra.mxu0 %v1067
      %1133 = vmatprep.mubr.f32.mxu0 0.0
      %1134 = vmatmul.mubr.f32.gmra.mrb[0].mxu0 %v1063
      %v1135 = vpop.f32.mrb[0].mxu0
      %v1136 = vadd.f32 0.0, %v1135
      %v1137 = vpop.f32.mrb[0].mxu0
      %v1138 = vadd.f32 0.0, %v1137
      %1139 = vdwg.mxu0
      %v1140 = vadd.f32 %v1053, %v1136
      %v1141 = vadd.f32 %v1054, %v1138
      %s1142 = scalar_lea.vmem %s1, 48
      %v1143 = vld [vmem:[%s1142] sm:$0xff]
      %v1145 = vsel %vm383, %v1143, 0
      %v1148 = vsel %vm383, %v248, 0
      %v1151 = vsel %vm383, %v249, 0
      %1153 = vmatprep.subr.mxu0 0.0
      %1154 = vmatpush1.xpose.msra.mxu0 %v533
      %1155 = vmatprep.subr.mxu0 0.0
      %1156 = vmatpush1.xpose.msra.mxu0 %v535
      %1157 = vmatprep.subr.mxu0 0.0
      %1158 = vmatpush1.xpose.msra.mxu0 %v537
      %1159 = vmatprep.subr.mxu0 0.0
      %1160 = vmatpush1.xpose.msra.mxu0 %v539
      %1161 = vmatprep.subr.mxu0 0.0
      %1162 = vmatpush1.xpose.msra.mxu0 %v541
      %1163 = vmatprep.subr.mxu0 0.0
      %1164 = vmatpush1.xpose.msra.mxu0 %v543
      %1165 = vmatprep.subr.mxu0 0.0
      %1166 = vmatpush1.xpose.msra.mxu0 %v545
      %1167 = vmatprep.subr.mxu0 0.0
      %1168 = vmatpush1.xpose.msra.mxu0 %v547
      %1169 = vmatprep.subr.mxu0 0.0
      %1170 = vmatpush1.xpose.msra.mxu0 %v549
      %1171 = vmatprep.subr.mxu0 0.0
      %1172 = vmatpush1.xpose.msra.mxu0 %v551
      %1173 = vmatprep.subr.mxu0 0.0
      %1174 = vmatpush1.xpose.msra.mxu0 %v553
      %1175 = vmatprep.subr.mxu0 0.0
      %1176 = vmatpush1.xpose.msra.mxu0 %v555
      %1177 = vmatprep.subr.mxu0 0.0
      %1178 = vmatpush1.xpose.msra.mxu0 %v557
      %1179 = vmatprep.subr.mxu0 0.0
      %1180 = vmatpush1.xpose.msra.mxu0 %v559
      %1181 = vmatprep.subr.mxu0 0.0
      %1182 = vmatpush1.xpose.msra.mxu0 %v561
      %1183 = vmatprep.subr.mxu0 0.0
      %1184 = vmatpush1.xpose.msra.mxu0 %v563
      %1185 = vmatprep.subr.mxu0 0.0
      %1186 = vmatpush1.xpose.msra.mxu0 %v565
      %1187 = vmatprep.subr.mxu0 0.0
      %1188 = vmatpush1.xpose.msra.mxu0 %v567
      %1189 = vmatprep.subr.mxu0 0.0
      %1190 = vmatpush1.xpose.msra.mxu0 %v569
      %1191 = vmatprep.subr.mxu0 0.0
      %1192 = vmatpush1.xpose.msra.mxu0 %v571
      %1193 = vmatprep.subr.mxu0 0.0
      %1194 = vmatpush1.xpose.msra.mxu0 %v573
      %1195 = vmatprep.subr.mxu0 0.0
      %1196 = vmatpush1.xpose.msra.mxu0 %v575
      %1197 = vmatprep.subr.mxu0 0.0
      %1198 = vmatpush1.xpose.msra.mxu0 %v577
      %1199 = vmatprep.subr.mxu0 0.0
      %1200 = vmatpush1.xpose.msra.mxu0 %v579
      %1201 = vmatprep.subr.mxu0 0.0
      %1202 = vmatpush1.xpose.msra.mxu0 %v581
      %1203 = vmatprep.subr.mxu0 0.0
      %1204 = vmatpush1.xpose.msra.mxu0 %v583
      %1205 = vmatprep.subr.mxu0 0.0
      %1206 = vmatpush1.xpose.msra.mxu0 %v585
      %1207 = vmatprep.subr.mxu0 0.0
      %1208 = vmatpush1.xpose.msra.mxu0 %v587
      %1209 = vmatprep.subr.mxu0 0.0
      %1210 = vmatpush1.xpose.msra.mxu0 %v889
      %1211 = vmatprep.subr.mxu0 0.0
      %1212 = vmatpush1.xpose.msra.mxu0 %v892
      %1213 = vmatprep.subr.mxu0 0.0
      %1214 = vmatpush1.xpose.msra.mxu0 %v1148
      %1215 = vmatprep.subr.mxu0 0.0
      %1216 = vmatpush1.xpose.msra.mxu0 %v1151
      %1217 = vmatprep.mubr.f32.mxu0 0.0
      %1218 = vmatmul.mubr.f32.gmra.mrb[0].mxu0 %v1145
      %v1219 = vpop.f32.mrb[0].mxu0
      %v1220 = vadd.f32 0.0, %v1219
      %v1221 = vpop.f32.mrb[0].mxu0
      %v1222 = vadd.f32 0.0, %v1221
      %1223 = vdwg.mxu0
      %v1224 = vadd.f32 %v1140, %v1220
      %v1225 = vadd.f32 %v1141, %v1222
      %v1227 = vrot.slane %v248, 1
      %v1228 = vrot.slane %v249, 1
      %v1229 = vsel %vm300, %v1227, %v1228
      %v1230 = vrot.slane %v250, 1
      %v1231 = vsel %vm300, %v1228, %v1230
      %s1232 = scalar_lea.vmem %s1, 56
      %v1233 = vld [vmem:[%s1232] sm:$0xff]
      %v1235 = vsel %vm383, %v1233, 0
      %v1237 = vsel %vm383, %v1229, 0
      %v1239 = vsel %vm383, %v1231, 0
      %1241 = vmatprep.subr.mxu0 0.0
      %1242 = vmatpush1.xpose.msra.mxu0 %v395
      %1243 = vmatprep.subr.mxu0 0.0
      %1244 = vmatpush1.xpose.msra.mxu0 %v397
      %1245 = vmatprep.subr.mxu0 0.0
      %1246 = vmatpush1.xpose.msra.mxu0 %v399
      %1247 = vmatprep.subr.mxu0 0.0
      %1248 = vmatpush1.xpose.msra.mxu0 %v401
      %1249 = vmatprep.subr.mxu0 0.0
      %1250 = vmatpush1.xpose.msra.mxu0 %v403
      %1251 = vmatprep.subr.mxu0 0.0
      %1252 = vmatpush1.xpose.msra.mxu0 %v405
      %1253 = vmatprep.subr.mxu0 0.0
      %1254 = vmatpush1.xpose.msra.mxu0 %v407
      %1255 = vmatprep.subr.mxu0 0.0
      %1256 = vmatpush1.xpose.msra.mxu0 %v409
      %1257 = vmatprep.subr.mxu0 0.0
      %1258 = vmatpush1.xpose.msra.mxu0 %v411
      %1259 = vmatprep.subr.mxu0 0.0
      %1260 = vmatpush1.xpose.msra.mxu0 %v413
      %1261 = vmatprep.subr.mxu0 0.0
      %1262 = vmatpush1.xpose.msra.mxu0 %v415
      %1263 = vmatprep.subr.mxu0 0.0
      %1264 = vmatpush1.xpose.msra.mxu0 %v417
      %1265 = vmatprep.subr.mxu0 0.0
      %1266 = vmatpush1.xpose.msra.mxu0 %v419
      %1267 = vmatprep.subr.mxu0 0.0
      %1268 = vmatpush1.xpose.msra.mxu0 %v421
      %1269 = vmatprep.subr.mxu0 0.0
      %1270 = vmatpush1.xpose.msra.mxu0 %v423
      %1271 = vmatprep.subr.mxu0 0.0
      %1272 = vmatpush1.xpose.msra.mxu0 %v425
      %1273 = vmatprep.subr.mxu0 0.0
      %1274 = vmatpush1.xpose.msra.mxu0 %v427
      %1275 = vmatprep.subr.mxu0 0.0
      %1276 = vmatpush1.xpose.msra.mxu0 %v429
      %1277 = vmatprep.subr.mxu0 0.0
      %1278 = vmatpush1.xpose.msra.mxu0 %v431
      %1279 = vmatprep.subr.mxu0 0.0
      %1280 = vmatpush1.xpose.msra.mxu0 %v433
      %1281 = vmatprep.subr.mxu0 0.0
      %1282 = vmatpush1.xpose.msra.mxu0 %v435
      %1283 = vmatprep.subr.mxu0 0.0
      %1284 = vmatpush1.xpose.msra.mxu0 %v437
      %1285 = vmatprep.subr.mxu0 0.0
      %1286 = vmatpush1.xpose.msra.mxu0 %v439
      %1287 = vmatprep.subr.mxu0 0.0
      %1288 = vmatpush1.xpose.msra.mxu0 %v441
      %1289 = vmatprep.subr.mxu0 0.0
      %1290 = vmatpush1.xpose.msra.mxu0 %v443
      %1291 = vmatprep.subr.mxu0 0.0
      %1292 = vmatpush1.xpose.msra.mxu0 %v445
      %1293 = vmatprep.subr.mxu0 0.0
      %1294 = vmatpush1.xpose.msra.mxu0 %v447
      %1295 = vmatprep.subr.mxu0 0.0
      %1296 = vmatpush1.xpose.msra.mxu0 %v449
      %1297 = vmatprep.subr.mxu0 0.0
      %1298 = vmatpush1.xpose.msra.mxu0 %v978
      %1299 = vmatprep.subr.mxu0 0.0
      %1300 = vmatpush1.xpose.msra.mxu0 %v980
      %1301 = vmatprep.subr.mxu0 0.0
      %1302 = vmatpush1.xpose.msra.mxu0 %v1237
      %1303 = vmatprep.subr.mxu0 0.0
      %1304 = vmatpush1.xpose.msra.mxu0 %v1239
      %1305 = vmatprep.mubr.f32.mxu0 0.0
      %1306 = vmatmul.mubr.f32.gmra.mrb[0].mxu0 %v1235
      %v1307 = vpop.f32.mrb[0].mxu0
      %v1308 = vadd.f32 0.0, %v1307
      %v1309 = vpop.f32.mrb[0].mxu0
      %v1310 = vadd.f32 0.0, %v1309
      %1311 = vdwg.mxu0
      %v1312 = vadd.f32 %v1224, %v1308
      %v1313 = vadd.f32 %v1225, %v1310
      %v1314 = vrot.slane %v248, 2
      %v1315 = vrot.slane %v249, 2
      %v1316 = vsel %vm660, %v1314, %v1315
      %v1317 = vrot.slane %v250, 2
      %v1318 = vsel %vm660, %v1315, %v1317
      %s1319 = scalar_lea.vmem %s1, 64
      %v1320 = vld [vmem:[%s1319] sm:$0xff]
      %v1322 = vsel %vm383, %v1320, 0
      %v1324 = vsel %vm383, %v1316, 0
      %v1326 = vsel %vm383, %v1318, 0
      %1328 = vmatprep.subr.mxu0 0.0
      %1329 = vmatpush1.xpose.msra.mxu0 %v754
      %1330 = vmatprep.subr.mxu0 0.0
      %1331 = vmatpush1.xpose.msra.mxu0 %v756
      %1332 = vmatprep.subr.mxu0 0.0
      %1333 = vmatpush1.xpose.msra.mxu0 %v758
      %1334 = vmatprep.subr.mxu0 0.0
      %1335 = vmatpush1.xpose.msra.mxu0 %v760
      %1336 = vmatprep.subr.mxu0 0.0
      %1337 = vmatpush1.xpose.msra.mxu0 %v762
      %1338 = vmatprep.subr.mxu0 0.0
      %1339 = vmatpush1.xpose.msra.mxu0 %v764
      %1340 = vmatprep.subr.mxu0 0.0
      %1341 = vmatpush1.xpose.msra.mxu0 %v766
      %1342 = vmatprep.subr.mxu0 0.0
      %1343 = vmatpush1.xpose.msra.mxu0 %v768
      %1344 = vmatprep.subr.mxu0 0.0
      %1345 = vmatpush1.xpose.msra.mxu0 %v770
      %1346 = vmatprep.subr.mxu0 0.0
      %1347 = vmatpush1.xpose.msra.mxu0 %v772
      %1348 = vmatprep.subr.mxu0 0.0
      %1349 = vmatpush1.xpose.msra.mxu0 %v774
      %1350 = vmatprep.subr.mxu0 0.0
      %1351 = vmatpush1.xpose.msra.mxu0 %v776
      %1352 = vmatprep.subr.mxu0 0.0
      %1353 = vmatpush1.xpose.msra.mxu0 %v778
      %1354 = vmatprep.subr.mxu0 0.0
      %1355 = vmatpush1.xpose.msra.mxu0 %v780
      %1356 = vmatprep.subr.mxu0 0.0
      %1357 = vmatpush1.xpose.msra.mxu0 %v782
      %1358 = vmatprep.subr.mxu0 0.0
      %1359 = vmatpush1.xpose.msra.mxu0 %v784
      %1360 = vmatprep.subr.mxu0 0.0
      %1361 = vmatpush1.xpose.msra.mxu0 %v786
      %1362 = vmatprep.subr.mxu0 0.0
      %1363 = vmatpush1.xpose.msra.mxu0 %v788
      %1364 = vmatprep.subr.mxu0 0.0
      %1365 = vmatpush1.xpose.msra.mxu0 %v790
      %1366 = vmatprep.subr.mxu0 0.0
      %1367 = vmatpush1.xpose.msra.mxu0 %v792
      %1368 = vmatprep.subr.mxu0 0.0
      %1369 = vmatpush1.xpose.msra.mxu0 %v794
      %1370 = vmatprep.subr.mxu0 0.0
      %1371 = vmatpush1.xpose.msra.mxu0 %v796
      %1372 = vmatprep.subr.mxu0 0.0
      %1373 = vmatpush1.xpose.msra.mxu0 %v798
      %1374 = vmatprep.subr.mxu0 0.0
      %1375 = vmatpush1.xpose.msra.mxu0 %v800
      %1376 = vmatprep.subr.mxu0 0.0
      %1377 = vmatpush1.xpose.msra.mxu0 %v802
      %1378 = vmatprep.subr.mxu0 0.0
      %1379 = vmatpush1.xpose.msra.mxu0 %v804
      %1380 = vmatprep.subr.mxu0 0.0
      %1381 = vmatpush1.xpose.msra.mxu0 %v806
      %1382 = vmatprep.subr.mxu0 0.0
      %1383 = vmatpush1.xpose.msra.mxu0 %v808
      %1384 = vmatprep.subr.mxu0 0.0
      %1385 = vmatpush1.xpose.msra.mxu0 %v1065
      %1386 = vmatprep.subr.mxu0 0.0
      %1387 = vmatpush1.xpose.msra.mxu0 %v1067
      %1388 = vmatprep.subr.mxu0 0.0
      %1389 = vmatpush1.xpose.msra.mxu0 %v1324
      %1390 = vmatprep.subr.mxu0 0.0
      %1391 = vmatpush1.xpose.msra.mxu0 %v1326
      %1392 = vmatprep.mubr.f32.mxu0 0.0
      %1393 = vmatmul.mubr.f32.gmra.mrb[0].mxu0 %v1322
      %v1394 = vpop.f32.mrb[0].mxu0
      %v1395 = vadd.f32 0.0, %v1394
      %v1396 = vpop.f32.mrb[0].mxu0
      %v1397 = vadd.f32 0.0, %v1396
      %1398 = vdwg.mxu0
      %v1399 = vadd.f32 %v1312, %v1395
      %v1400 = vadd.f32 %v1313, %v1397
      %v1401 = vld [vmem:[%s2] sm:$0xff]
      %1403 = vset.pattern.permute.xlu0 0
      %1404 = vperm.xlu0 %1403, %v1401
      %v1405 = vpop.permute.xlu0 %1404
      %v1407 = vadd.f32 %v1399, %v1405
      %v1408 = vadd.f32 %v1400, %v1405
      %1409 = vst [vmem:[%s192] sm:$0xff] %v1407
      %1410 = vst [vmem:[%s192 + $0x8] sm:$0xff] %v1408
      %s1411 = smul.u32 2, %s19
      %p1412 = scmp.lt.s32.totalorder %s18, 1
      %s1413 = scalar_select %p1412, %s18, 1
      %p1414 = scmp.lt.s32.totalorder %s1411, 1
      %s1415 = scalar_select %p1414, %s1411, 1
      %s1416 = smul.addr %s1413, 2
      %s1417 = sadd.s32 %s1415, %s1416
      %s1418 = smul.addr %s1417, 8
      %s1419 = scalar_lea.vmem %s3, %s1418
      // Predicated region
      $region33: #{_lambda_.1} parent=31 // pred_check
        %p1420 = pneg %p114
      $region34: #{_lambda_.1} parent=31 // pred_check_branch
        %1422 = sbr.rel (%p1420) target = $region36
      $region35: #{_lambda_.1} parent=31 // pred_region
        %s1423 = smul.u32 2, %s19
      $region36: #{_lambda_.1} parent=31 // pred_fallthru
        _
    $region32: #{_lambda_.1} parent=5 // pred_fallthru
      _
    %p1424 = scmp.le.s32.totalorder 2, %s9
    // Predicated region
    $region37: #{_lambda_.1} parent=5 // pred_check
      %p1425 = pneg %p1424
    $region38: #{_lambda_.1} parent=5 // pred_check_branch
      %1427 = sbr.rel (%p1425) target = $region40
    $region39: #{_lambda_.1} parent=5 // pred_region
      %s1428 = ssub.s32 %s9, 2
      // Predicated region
      $region41: #{_lambda_.1} parent=39 // pred_check
        %p1429 = pneg %p120
      $region42: #{_lambda_.1} parent=39 // pred_check_branch
        %1431 = sbr.rel (%p1429) target = $region44
      $region43: #{_lambda_.1} parent=39 // pred_region
        %s1432 = smul.u32 2, %s21
        %p1433 = scmp.lt.s32.totalorder %s20, 1
        %s1434 = scalar_select %p1433, %s20, 1
        %p1435 = scmp.lt.s32.totalorder %s1432, 1
        %s1436 = scalar_select %p1435, %s1432, 1
        %s1437 = smul.addr %s1434, 2
        %s1438 = sadd.s32 %s1436, %s1437
        %s1439 = smul.addr %s1438, 8
        %s1440 = scalar_lea.vmem %s3, %s1439
      $region44: #{_lambda_.1} parent=39 // pred_fallthru
        _
    $region40: #{_lambda_.1} parent=5 // pred_fallthru
      _
  $region6: #{_lambda_.1} parent=0 // loop_footer
    %s13 = sadd.s32 1, %s9
  $region7: #{_lambda_.1} parent=0 // loop_footer_branch
    %8 = sbr.rel target = $region3
  $region8: #{_lambda_.1} parent=0 // loop_exit
    _

</llo_original>
